<compile_context>
chip_gen: v7x
topology: tpu7x:2x2x1
jax: 0.10.0
libtpu: 0.0.40
codegen_flags: <defaults>
</compile_context>

<pallas_src>
import jax
import jax.numpy as jnp
from jax.experimental import pallas as pl
from jax.experimental.pallas import tpu as pltpu

HIDDEN = 64
LEAKY_SLOPE = 0.1
BN_EPS = 1e-5


# ---------------------------------------------------------------------------
# Kernel: one (TB, D) batch tile of the full forward pass.
# ---------------------------------------------------------------------------
def stock_predictor_kernel(
    x_ref,
    w1_ref, b1_ref,
    w2_ref, b2_ref,
    w3_ref, b3_ref,
    wih_ref, bih_ref,
    wp1_ref, bp1_ref,
    whead_ref, bhead_ref,
    out_ref,
):
    x = x_ref[...]                          # (TB, D) f32
    xb = x.astype(jnp.bfloat16)             # MXU operand dtype

    def lin_lrelu(hb, w_ref, b_ref):
        # Linear (eval-BN already folded into w/b) -> LeakyReLU(0.1).
        y = jnp.dot(hb, w_ref[...], preferred_element_type=jnp.float32) + b_ref[...]
        return jnp.where(y > 0, y, LEAKY_SLOPE * y)

    # feature extractor: 3 x (Linear+BN -> LeakyReLU -> Dropout[eval = identity])
    h = lin_lrelu(xb, w1_ref, b1_ref)
    h = lin_lrelu(h.astype(jnp.bfloat16), w2_ref, b2_ref)
    h = lin_lrelu(h.astype(jnp.bfloat16), w3_ref, b3_ref)

    # single-step LSTM with zero initial state.
    # Forget-gate columns were pruned at init (f * c0 == 0 exactly) and
    # W_hh @ h0 == 0, so: gates = h @ W_ih'[i|g|o] + (b_ih + b_hh)'[i|g|o].
    gates = jnp.dot(h.astype(jnp.bfloat16), wih_ref[...],
                    preferred_element_type=jnp.float32) + bih_ref[...]
    i_g = jax.nn.sigmoid(gates[:, 0 * HIDDEN:1 * HIDDEN])
    g_g = jnp.tanh(gates[:, 1 * HIDDEN:2 * HIDDEN])
    o_g = jax.nn.sigmoid(gates[:, 2 * HIDDEN:3 * HIDDEN])
    h = o_g * jnp.tanh(i_g * g_g)

    # predictor first layer: Linear(64,32)+BN folded -> LeakyReLU -> Dropout[id]
    p = lin_lrelu(h.astype(jnp.bfloat16), wp1_ref, bp1_ref)

    # fused head + shortcut:
    #   [p | x] @ [[wp2], [wsc]] + (bp2 + bsc)  ==  predictor(p) + shortcut(x)
    px = jnp.concatenate([p.astype(jnp.bfloat16), xb], axis=-1)
    out = jnp.dot(px, whead_ref[...], preferred_element_type=jnp.float32) + bhead_ref[...]
    out_ref[...] = out


# ---------------------------------------------------------------------------
# Wrapper: batch grid, weights as grid-invariant full blocks.
# ---------------------------------------------------------------------------
def stock_predictor_forward(x, kernel_params, *, tile_b=128):
    B, D = x.shape
    n_blocks = pl.cdiv(B, tile_b)
    b_padded = n_blocks * tile_b
    if b_padded != B:
        x = jnp.pad(x, ((0, b_padded - B), (0, 0)))

    in_specs = [pl.BlockSpec((tile_b, D), lambda i: (i, 0))]
    in_specs += [pl.BlockSpec(p.shape, lambda i: (0, 0)) for p in kernel_params]

    out = pl.pallas_call(
        stock_predictor_kernel,
        out_shape=jax.ShapeDtypeStruct((b_padded, 1), jnp.float32),
        grid=(n_blocks,),
        in_specs=in_specs,
        out_specs=pl.BlockSpec((tile_b, 1), lambda i: (i, 0)),
        compiler_params=pltpu.CompilerParams(
            dimension_semantics=("parallel",)),
    )(x, *kernel_params)
    return out[:B]


# ---------------------------------------------------------------------------
# PyTorch-equivalent parameters (f32, untransformed) + kernel-param transform.
# ---------------------------------------------------------------------------
def init_torch_params(key, input_dim):
    hidden = HIDDEN
    keys = jax.random.split(key, 9)

    def kaiming_t(k, fan_in, fan_out):
        # nn.init.kaiming_normal_(W, nonlinearity='leaky_relu'), a=0:
        # std = sqrt(2 / fan_in); stored transposed as (in, out).
        std = (2.0 / fan_in) ** 0.5
        return (std * jax.random.normal(k, (fan_in, fan_out))).astype(jnp.float32)

    def bn_stats(n):
        return dict(gamma=jnp.ones((1, n), jnp.float32),
                    beta=jnp.zeros((1, n), jnp.float32),
                    mean=jnp.zeros((1, n), jnp.float32),
                    var=jnp.ones((1, n), jnp.float32))

    k_lim = 1.0 / (hidden ** 0.5)  # PyTorch LSTM default U(-1/sqrt(H), 1/sqrt(H))
    return dict(
        wsc=kaiming_t(keys[0], input_dim, 1), bsc=jnp.zeros((1, 1), jnp.float32),
        w1=kaiming_t(keys[1], input_dim, 256), b1=jnp.zeros((1, 256), jnp.float32),
        bn1=bn_stats(256),
        w2=kaiming_t(keys[2], 256, 128), b2=jnp.zeros((1, 128), jnp.float32),
        bn2=bn_stats(128),
        w3=kaiming_t(keys[3], 128, hidden), b3=jnp.zeros((1, hidden), jnp.float32),
        bn3=bn_stats(hidden),
        wih=jax.random.uniform(keys[4], (hidden, 4 * hidden), jnp.float32, -k_lim, k_lim),
        b_ih=jax.random.uniform(keys[5], (1, 4 * hidden), jnp.float32, -k_lim, k_lim),
        b_hh=jax.random.uniform(keys[6], (1, 4 * hidden), jnp.float32, -k_lim, k_lim),
        wp1=kaiming_t(keys[7], hidden, 32), bp1=jnp.zeros((1, 32), jnp.float32),
        bnp=bn_stats(32),
        wp2=kaiming_t(keys[8], 32, 1), bp2=jnp.zeros((1, 1), jnp.float32),
    )


def _fold_bn(w, b, bn):
    scale = bn["gamma"] / jnp.sqrt(bn["var"] + BN_EPS)
    shift = bn["beta"] - bn["mean"] * scale
    return w * scale, b * scale + shift


def prepare_kernel_params(p):
    """One-time transform: BN fold, forget-gate prune, shortcut fusion, bf16 weights."""
    H = HIDDEN
    w1, b1 = _fold_bn(p["w1"], p["b1"], p["bn1"])
    w2, b2 = _fold_bn(p["w2"], p["b2"], p["bn2"])
    w3, b3 = _fold_bn(p["w3"], p["b3"], p["bn3"])
    wp1, bp1 = _fold_bn(p["wp1"], p["bp1"], p["bnp"])

    # Prune forget-gate columns (c0 == 0): keep i | g | o of PyTorch's i|f|g|o.
    wih_full = p["wih"]
    bih_full = p["b_ih"] + p["b_hh"]      # recurrent matmul vanishes (h0 == 0)
    wih = jnp.concatenate([wih_full[:, 0:H], wih_full[:, 2 * H:4 * H]], axis=1)  # (H, 3H)
    bih = jnp.concatenate([bih_full[:, 0:H], bih_full[:, 2 * H:4 * H]], axis=1)  # (1, 3H)

    # Fuse predictor output layer with the shortcut branch.
    whead = jnp.concatenate([p["wp2"], p["wsc"]], axis=0)   # (32 + D, 1)
    bhead = p["bp2"] + p["bsc"]                             # (1, 1)

    bf16 = lambda a: a.astype(jnp.bfloat16)
    return (bf16(w1), b1, bf16(w2), b2, bf16(w3), b3,
            bf16(wih), bih, bf16(wp1), bp1, bf16(whead), bhead)


# ---------------------------------------------------------------------------
# Reference: mirrors the PyTorch module structure (BN separate, full LSTM gates,
# separate shortcut), with bf16 GEMM operands / f32 accumulation like the kernel.
# ---------------------------------------------------------------------------
def reference_forward(x, p):
    H = HIDDEN

    def mm(a, w):
        return jnp.dot(a.astype(jnp.bfloat16), w.astype(jnp.bfloat16),
                       preferred_element_type=jnp.float32)

    def layer(h, w, b, bn):
        y = mm(h, w) + b
        scale = bn["gamma"] / jnp.sqrt(bn["var"] + BN_EPS)
        y = (y - bn["mean"]) * scale + bn["beta"]
        return jnp.where(y > 0, y, LEAKY_SLOPE * y)

    identity = mm(x, p["wsc"]) + p["bsc"]
    h = layer(x, p["w1"], p["b1"], p["bn1"])
    h = layer(h, p["w2"], p["b2"], p["bn2"])
    h = layer(h, p["w3"], p["b3"], p["bn3"])

    gates = mm(h, p["wih"]) + p["b_ih"] + p["b_hh"]
    i_g = jax.nn.sigmoid(gates[:, 0 * H:1 * H])
    f_g = jax.nn.sigmoid(gates[:, 1 * H:2 * H])
    g_g = jnp.tanh(gates[:, 2 * H:3 * H])
    o_g = jax.nn.sigmoid(gates[:, 3 * H:4 * H])
    c = f_g * jnp.zeros_like(g_g) + i_g * g_g     # c0 == 0
    h = o_g * jnp.tanh(c)

    pr = layer(h, p["wp1"], p["bp1"], p["bnp"])
    return mm(pr, p["wp2"]) + p["bp2"] + identity


if __name__ == "__main__":
    key = jax.random.PRNGKey(0)
    batch, input_dim = 256, 32          # grid of 2 batch tiles (TB = 128)
    kx, kp = jax.random.split(key)
    x = jax.random.normal(kx, (batch, input_dim), jnp.float32)

    torch_params = init_torch_params(kp, input_dim)
    kernel_params = prepare_kernel_params(torch_params)

    out = stock_predictor_forward(x, kernel_params, tile_b=128)
    jax.block_until_ready(out)

    ref = reference_forward(x, torch_params)
    assert out.shape == (batch, 1), out.shape
    max_err = jnp.max(jnp.abs(out - ref))
    assert jnp.allclose(out, ref, atol=2e-2, rtol=2e-2), max_err
    print("KERNEL_OK")
</pallas_src>

<mosaic_0001>
module attributes {stable_mosaic.version = 11 : i64} {
  func.func @stock_predictor_kernel(%arg0: i32, %arg1: memref<128x32xf32, #tpu.memory_space<vmem>>, %arg2: memref<32x256xbf16, #tpu.memory_space<vmem>>, %arg3: memref<1x256xf32, #tpu.memory_space<vmem>>, %arg4: memref<256x128xbf16, #tpu.memory_space<vmem>>, %arg5: memref<1x128xf32, #tpu.memory_space<vmem>>, %arg6: memref<128x64xbf16, #tpu.memory_space<vmem>>, %arg7: memref<1x64xf32, #tpu.memory_space<vmem>>, %arg8: memref<64x192xbf16, #tpu.memory_space<vmem>>, %arg9: memref<1x192xf32, #tpu.memory_space<vmem>>, %arg10: memref<64x32xbf16, #tpu.memory_space<vmem>>, %arg11: memref<1x32xf32, #tpu.memory_space<vmem>>, %arg12: memref<64x1xbf16, #tpu.memory_space<vmem>>, %arg13: memref<1x1xf32, #tpu.memory_space<vmem>>, %arg14: memref<128x1xf32, #tpu.memory_space<vmem>>) attributes {dimension_semantics = [#tpu.dimension_semantics<parallel>], iteration_bounds = array<i64: 2>, scalar_prefetch = 0 : i64, scratch_operands = 0 : i64, tpu.core_type = #tpu.core_type<tc>, window_params = [{transform_indices = @transform_0, window_bounds = array<i64: 128, 32>}, {pipeline_mode = #tpu.pipeline_mode<synchronous>, transform_indices = @transform_1, window_bounds = array<i64: 32, 256>}, {pipeline_mode = #tpu.pipeline_mode<synchronous>, transform_indices = @transform_2, window_bounds = array<i64: 1, 256>}, {pipeline_mode = #tpu.pipeline_mode<synchronous>, transform_indices = @transform_3, window_bounds = array<i64: 256, 128>}, {pipeline_mode = #tpu.pipeline_mode<synchronous>, transform_indices = @transform_4, window_bounds = array<i64: 1, 128>}, {pipeline_mode = #tpu.pipeline_mode<synchronous>, transform_indices = @transform_5, window_bounds = array<i64: 128, 64>}, {pipeline_mode = #tpu.pipeline_mode<synchronous>, transform_indices = @transform_6, window_bounds = array<i64: 1, 64>}, {pipeline_mode = #tpu.pipeline_mode<synchronous>, transform_indices = @transform_7, window_bounds = array<i64: 64, 192>}, {pipeline_mode = #tpu.pipeline_mode<synchronous>, transform_indices = @transform_8, window_bounds = array<i64: 1, 192>}, {pipeline_mode = #tpu.pipeline_mode<synchronous>, transform_indices = @transform_9, window_bounds = array<i64: 64, 32>}, {pipeline_mode = #tpu.pipeline_mode<synchronous>, transform_indices = @transform_10, window_bounds = array<i64: 1, 32>}, {pipeline_mode = #tpu.pipeline_mode<synchronous>, transform_indices = @transform_11, window_bounds = array<i64: 64, 1>}, {pipeline_mode = #tpu.pipeline_mode<synchronous>, transform_indices = @transform_12, window_bounds = array<i64: 1, 1>}, {transform_indices = @transform_13, window_bounds = array<i64: 128, 1>}]} {
    %c0 = arith.constant 0 : index
    %c0_0 = arith.constant 0 : index
    %0 = vector.load %arg1[%c0, %c0_0] : memref<128x32xf32, #tpu.memory_space<vmem>>, vector<128x32xf32>
    %1 = arith.truncf %0 : vector<128x32xf32> to vector<128x32xbf16>
    %c0_1 = arith.constant 0 : index
    %c0_2 = arith.constant 0 : index
    %2 = vector.load %arg2[%c0_1, %c0_2] : memref<32x256xbf16, #tpu.memory_space<vmem>>, vector<32x256xbf16>
    %cst = arith.constant dense<0.000000e+00> : vector<128x256xf32>
    %3 = tpu.matmul %1, %2, %cst {dimension_numbers = #tpu.dot_dimension_numbers<[1], [0], [0], [1], [0, 0, 1, 1], [], []>} : vector<128x32xbf16>, vector<32x256xbf16>, vector<128x256xf32> -> vector<128x256xf32>
    %c0_3 = arith.constant 0 : index
    %c0_4 = arith.constant 0 : index
    %4 = vector.load %arg3[%c0_3, %c0_4] : memref<1x256xf32, #tpu.memory_space<vmem>>, vector<1x256xf32>
    %5 = vector.broadcast %4 : vector<1x256xf32> to vector<128x256xf32>
    %6 = arith.addf %3, %5 : vector<128x256xf32>
    %cst_5 = arith.constant 0.000000e+00 : f32
    %7 = vector.broadcast %cst_5 : f32 to vector<128x256xf32>
    %8 = arith.cmpf ogt, %6, %7 : vector<128x256xf32>
    %cst_6 = arith.constant 1.000000e-01 : f32
    %9 = vector.broadcast %cst_6 : f32 to vector<128x256xf32>
    %10 = arith.mulf %9, %6 : vector<128x256xf32>
    %11 = arith.select %8, %6, %10 : vector<128x256xi1>, vector<128x256xf32>
    %12 = arith.truncf %11 : vector<128x256xf32> to vector<128x256xbf16>
    %c0_7 = arith.constant 0 : index
    %c0_8 = arith.constant 0 : index
    %13 = vector.load %arg4[%c0_7, %c0_8] : memref<256x128xbf16, #tpu.memory_space<vmem>>, vector<256x128xbf16>
    %cst_9 = arith.constant dense<0.000000e+00> : vector<128x128xf32>
    %14 = tpu.matmul %12, %13, %cst_9 {dimension_numbers = #tpu.dot_dimension_numbers<[1], [0], [0], [1], [0, 0, 1, 1], [], []>} : vector<128x256xbf16>, vector<256x128xbf16>, vector<128x128xf32> -> vector<128x128xf32>
    %c0_10 = arith.constant 0 : index
    %c0_11 = arith.constant 0 : index
    %15 = vector.load %arg5[%c0_10, %c0_11] : memref<1x128xf32, #tpu.memory_space<vmem>>, vector<1x128xf32>
    %16 = vector.broadcast %15 : vector<1x128xf32> to vector<128x128xf32>
    %17 = arith.addf %14, %16 : vector<128x128xf32>
    %cst_12 = arith.constant 0.000000e+00 : f32
    %18 = vector.broadcast %cst_12 : f32 to vector<128x128xf32>
    %19 = arith.cmpf ogt, %17, %18 : vector<128x128xf32>
    %cst_13 = arith.constant 1.000000e-01 : f32
    %20 = vector.broadcast %cst_13 : f32 to vector<128x128xf32>
    %21 = arith.mulf %20, %17 : vector<128x128xf32>
    %22 = arith.select %19, %17, %21 : vector<128x128xi1>, vector<128x128xf32>
    %23 = arith.truncf %22 : vector<128x128xf32> to vector<128x128xbf16>
    %c0_14 = arith.constant 0 : index
    %c0_15 = arith.constant 0 : index
    %24 = vector.load %arg6[%c0_14, %c0_15] : memref<128x64xbf16, #tpu.memory_space<vmem>>, vector<128x64xbf16>
    %cst_16 = arith.constant dense<0.000000e+00> : vector<128x64xf32>
    %25 = tpu.matmul %23, %24, %cst_16 {dimension_numbers = #tpu.dot_dimension_numbers<[1], [0], [0], [1], [0, 0, 1, 1], [], []>} : vector<128x128xbf16>, vector<128x64xbf16>, vector<128x64xf32> -> vector<128x64xf32>
    %c0_17 = arith.constant 0 : index
    %c0_18 = arith.constant 0 : index
    %26 = vector.load %arg7[%c0_17, %c0_18] : memref<1x64xf32, #tpu.memory_space<vmem>>, vector<1x64xf32>
    %27 = vector.broadcast %26 : vector<1x64xf32> to vector<128x64xf32>
    %28 = arith.addf %25, %27 : vector<128x64xf32>
    %cst_19 = arith.constant 0.000000e+00 : f32
    %29 = vector.broadcast %cst_19 : f32 to vector<128x64xf32>
    %30 = arith.cmpf ogt, %28, %29 : vector<128x64xf32>
    %cst_20 = arith.constant 1.000000e-01 : f32
    %31 = vector.broadcast %cst_20 : f32 to vector<128x64xf32>
    %32 = arith.mulf %31, %28 : vector<128x64xf32>
    %33 = arith.select %30, %28, %32 : vector<128x64xi1>, vector<128x64xf32>
    %34 = arith.truncf %33 : vector<128x64xf32> to vector<128x64xbf16>
    %c0_21 = arith.constant 0 : index
    %c0_22 = arith.constant 0 : index
    %35 = vector.load %arg8[%c0_21, %c0_22] : memref<64x192xbf16, #tpu.memory_space<vmem>>, vector<64x192xbf16>
    %cst_23 = arith.constant dense<0.000000e+00> : vector<128x192xf32>
    %36 = tpu.matmul %34, %35, %cst_23 {dimension_numbers = #tpu.dot_dimension_numbers<[1], [0], [0], [1], [0, 0, 1, 1], [], []>} : vector<128x64xbf16>, vector<64x192xbf16>, vector<128x192xf32> -> vector<128x192xf32>
    %c0_24 = arith.constant 0 : index
    %c0_25 = arith.constant 0 : index
    %37 = vector.load %arg9[%c0_24, %c0_25] : memref<1x192xf32, #tpu.memory_space<vmem>>, vector<1x192xf32>
    %38 = vector.broadcast %37 : vector<1x192xf32> to vector<128x192xf32>
    %39 = arith.addf %36, %38 : vector<128x192xf32>
    %40 = vector.extract_strided_slice %39 {offsets = [0, 0], sizes = [128, 64], strides = [1, 1]} : vector<128x192xf32> to vector<128x64xf32>
    %41 = arith.negf %40 : vector<128x64xf32>
    %42 = math.exp %41 : vector<128x64xf32>
    %cst_26 = arith.constant 1.000000e+00 : f32
    %43 = vector.broadcast %cst_26 : f32 to vector<128x64xf32>
    %44 = arith.addf %43, %42 : vector<128x64xf32>
    %45 = arith.divf %43, %44 : vector<128x64xf32>
    %46 = vector.extract_strided_slice %39 {offsets = [0, 64], sizes = [128, 64], strides = [1, 1]} : vector<128x192xf32> to vector<128x64xf32>
    %47 = math.tanh %46 : vector<128x64xf32>
    %48 = vector.extract_strided_slice %39 {offsets = [0, 128], sizes = [128, 64], strides = [1, 1]} : vector<128x192xf32> to vector<128x64xf32>
    %49 = arith.negf %48 : vector<128x64xf32>
    %50 = math.exp %49 : vector<128x64xf32>
    %cst_27 = arith.constant 1.000000e+00 : f32
    %51 = vector.broadcast %cst_27 : f32 to vector<128x64xf32>
    %52 = arith.addf %51, %50 : vector<128x64xf32>
    %53 = arith.divf %51, %52 : vector<128x64xf32>
    %54 = arith.mulf %45, %47 : vector<128x64xf32>
    %55 = math.tanh %54 : vector<128x64xf32>
    %56 = arith.mulf %53, %55 : vector<128x64xf32>
    %57 = arith.truncf %56 : vector<128x64xf32> to vector<128x64xbf16>
    %c0_28 = arith.constant 0 : index
    %c0_29 = arith.constant 0 : index
    %58 = vector.load %arg10[%c0_28, %c0_29] : memref<64x32xbf16, #tpu.memory_space<vmem>>, vector<64x32xbf16>
    %cst_30 = arith.constant dense<0.000000e+00> : vector<128x32xf32>
    %59 = tpu.matmul %57, %58, %cst_30 {dimension_numbers = #tpu.dot_dimension_numbers<[1], [0], [0], [1], [0, 0, 1, 1], [], []>} : vector<128x64xbf16>, vector<64x32xbf16>, vector<128x32xf32> -> vector<128x32xf32>
    %c0_31 = arith.constant 0 : index
    %c0_32 = arith.constant 0 : index
    %60 = vector.load %arg11[%c0_31, %c0_32] : memref<1x32xf32, #tpu.memory_space<vmem>>, vector<1x32xf32>
    %61 = vector.broadcast %60 : vector<1x32xf32> to vector<128x32xf32>
    %62 = arith.addf %59, %61 : vector<128x32xf32>
    %cst_33 = arith.constant 0.000000e+00 : f32
    %63 = vector.broadcast %cst_33 : f32 to vector<128x32xf32>
    %64 = arith.cmpf ogt, %62, %63 : vector<128x32xf32>
    %cst_34 = arith.constant 1.000000e-01 : f32
    %65 = vector.broadcast %cst_34 : f32 to vector<128x32xf32>
    %66 = arith.mulf %65, %62 : vector<128x32xf32>
    %67 = arith.select %64, %62, %66 : vector<128x32xi1>, vector<128x32xf32>
    %68 = arith.truncf %67 : vector<128x32xf32> to vector<128x32xbf16>
    %69 = tpu.concatenate %68, %1 in 1 : vector<128x32xbf16>, vector<128x32xbf16> -> vector<128x64xbf16>
    %c0_35 = arith.constant 0 : index
    %c0_36 = arith.constant 0 : index
    %70 = vector.load %arg12[%c0_35, %c0_36] : memref<64x1xbf16, #tpu.memory_space<vmem>>, vector<64x1xbf16>
    %cst_37 = arith.constant dense<0.000000e+00> : vector<128x1xf32>
    %71 = tpu.matmul %69, %70, %cst_37 {dimension_numbers = #tpu.dot_dimension_numbers<[1], [0], [0], [1], [0, 0, 1, 1], [], []>} : vector<128x64xbf16>, vector<64x1xbf16>, vector<128x1xf32> -> vector<128x1xf32>
    %c0_38 = arith.constant 0 : index
    %c0_39 = arith.constant 0 : index
    %72 = vector.load %arg13[%c0_38, %c0_39] : memref<1x1xf32, #tpu.memory_space<vmem>>, vector<1x1xf32>
    %73 = vector.broadcast %72 : vector<1x1xf32> to vector<128x1xf32>
    %74 = arith.addf %71, %73 : vector<128x1xf32>
    %c0_40 = arith.constant 0 : index
    %c0_41 = arith.constant 0 : index
    %75 = vector.load %arg14[%c0_40, %c0_41] : memref<128x1xf32, #tpu.memory_space<vmem>>, vector<128x1xf32>
    tpu.vector_store %arg14[%c0_40, %c0_41], %74 {strides = array<i32>} : memref<128x1xf32, #tpu.memory_space<vmem>>, vector<128x1xf32>,
    return
  }
  func.func @transform_0(%arg0: i32) -> (i32, i32) {
    %c0_i32 = arith.constant 0 : i32
    %c0_i32_0 = arith.constant 0 : i32
    return %arg0, %c0_i32 : i32, i32
  }
  func.func @transform_1(%arg0: i32) -> (i32, i32) {
    %c0_i32 = arith.constant 0 : i32
    %c0_i32_0 = arith.constant 0 : i32
    %c0_i32_1 = arith.constant 0 : i32
    return %c0_i32, %c0_i32_0 : i32, i32
  }
  func.func @transform_2(%arg0: i32) -> (i32, i32) {
    %c0_i32 = arith.constant 0 : i32
    %c0_i32_0 = arith.constant 0 : i32
    %c0_i32_1 = arith.constant 0 : i32
    return %c0_i32, %c0_i32_0 : i32, i32
  }
  func.func @transform_3(%arg0: i32) -> (i32, i32) {
    %c0_i32 = arith.constant 0 : i32
    %c0_i32_0 = arith.constant 0 : i32
    %c0_i32_1 = arith.constant 0 : i32
    return %c0_i32, %c0_i32_0 : i32, i32
  }
  func.func @transform_4(%arg0: i32) -> (i32, i32) {
    %c0_i32 = arith.constant 0 : i32
    %c0_i32_0 = arith.constant 0 : i32
    %c0_i32_1 = arith.constant 0 : i32
    return %c0_i32, %c0_i32_0 : i32, i32
  }
  func.func @transform_5(%arg0: i32) -> (i32, i32) {
    %c0_i32 = arith.constant 0 : i32
    %c0_i32_0 = arith.constant 0 : i32
    %c0_i32_1 = arith.constant 0 : i32
    return %c0_i32, %c0_i32_0 : i32, i32
  }
  func.func @transform_6(%arg0: i32) -> (i32, i32) {
    %c0_i32 = arith.constant 0 : i32
    %c0_i32_0 = arith.constant 0 : i32
    %c0_i32_1 = arith.constant 0 : i32
    return %c0_i32, %c0_i32_0 : i32, i32
  }
  func.func @transform_7(%arg0: i32) -> (i32, i32) {
    %c0_i32 = arith.constant 0 : i32
    %c0_i32_0 = arith.constant 0 : i32
    %c0_i32_1 = arith.constant 0 : i32
    return %c0_i32, %c0_i32_0 : i32, i32
  }
  func.func @transform_8(%arg0: i32) -> (i32, i32) {
    %c0_i32 = arith.constant 0 : i32
    %c0_i32_0 = arith.constant 0 : i32
    %c0_i32_1 = arith.constant 0 : i32
    return %c0_i32, %c0_i32_0 : i32, i32
  }
  func.func @transform_9(%arg0: i32) -> (i32, i32) {
    %c0_i32 = arith.constant 0 : i32
    %c0_i32_0 = arith.constant 0 : i32
    %c0_i32_1 = arith.constant 0 : i32
    return %c0_i32, %c0_i32_0 : i32, i32
  }
  func.func @transform_10(%arg0: i32) -> (i32, i32) {
    %c0_i32 = arith.constant 0 : i32
    %c0_i32_0 = arith.constant 0 : i32
    %c0_i32_1 = arith.constant 0 : i32
    return %c0_i32, %c0_i32_0 : i32, i32
  }
  func.func @transform_11(%arg0: i32) -> (i32, i32) {
    %c0_i32 = arith.constant 0 : i32
    %c0_i32_0 = arith.constant 0 : i32
    %c0_i32_1 = arith.constant 0 : i32
    return %c0_i32, %c0_i32_0 : i32, i32
  }
  func.func @transform_12(%arg0: i32) -> (i32, i32) {
    %c0_i32 = arith.constant 0 : i32
    %c0_i32_0 = arith.constant 0 : i32
    %c0_i32_1 = arith.constant 0 : i32
    return %c0_i32, %c0_i32_0 : i32, i32
  }
  func.func @transform_13(%arg0: i32) -> (i32, i32) {
    %c0_i32 = arith.constant 0 : i32
    %c0_i32_0 = arith.constant 0 : i32
    return %arg0, %c0_i32 : i32, i32
  }
}

</mosaic_0001>

<llo_original>
// kernel: tpu_custom_call.1
$region0: #{tpu_custom_call.1}
  #allocation0 [shape = 'u32[]', space=smem, size = 0x4, offset = 0x4, fixed_abs, tag = 'smem constant byte address 0x4 - core index']
  #allocation1 [shape = 'u32[144,128]{1,0:T(1,128)}', space=vmem, size = 0x12000, scoped, tag = 'internal scratch']
  #allocation2 [shape = 'f32[1,1]{1,0:T(1,128)S(1)}', space=vmem, size = 0x200, scoped, tag = 'scoped memory for tpu_custom_call.1']
  %s0 = inlined_call_operand.vmem [shape: f32[256,32], index: 0, kind: input, shape index: {}]
  %s1 = inlined_call_operand.vmem [shape: bf16[32,256], index: 1, kind: input, shape index: {}]
  %s2 = inlined_call_operand.vmem [shape: f32[1,256], index: 2, kind: input, shape index: {}]
  %s3 = inlined_call_operand.vmem [shape: bf16[256,128], index: 3, kind: input, shape index: {}]
  %s4 = inlined_call_operand.vmem [shape: f32[1,128], index: 4, kind: input, shape index: {}]
  %s5 = inlined_call_operand.vmem [shape: bf16[128,64], index: 5, kind: input, shape index: {}]
  %s6 = inlined_call_operand.vmem [shape: f32[1,64], index: 6, kind: input, shape index: {}]
  %s7 = inlined_call_operand.vmem [shape: bf16[64,192], index: 7, kind: input, shape index: {}]
  %s8 = inlined_call_operand.vmem [shape: f32[1,192], index: 8, kind: input, shape index: {}]
  %s9 = inlined_call_operand.vmem [shape: bf16[64,32], index: 9, kind: input, shape index: {}]
  %s10 = inlined_call_operand.vmem [shape: f32[1,32], index: 10, kind: input, shape index: {}]
  %s11 = inlined_call_operand.vmem [shape: bf16[64,1], index: 11, kind: input, shape index: {}]
  %s12 = inlined_call_operand.<no memory space> [shape: f32[1,1], index: 12, kind: input, shape index: {}]
  %s13 = inlined_call_operand.vmem [shape: f32[256,1], index: 13, kind: output, shape index: {}]
  %s14 = sld [smem:[#allocation0]]
  $region85: #{tpu_custom_call.1} parent=0
    _
  %s16 = ssub.s32 1, %s14
  %s17 = scalar_select 0, %s16, %s14
  %v18 = vstv %s12
  %19 = vst [vmem:[#allocation2] sm:$0x1] %v18
  loop: start=0, step=1, limit=4
  $region2: #{tpu_custom_call.1} parent=0 // loop_pre_header
    _
  $region3: #{tpu_custom_call.1} parent=0 // loop_header
    %s21 = sphi 0, %s25
    %p22 = scmp.ge.s32.totalorder %s21, 4
    %s31 = sphi 0, %s33
    %s34 = sphi 0, %s31
    %s35 = sphi 0, %s34
    %s51 = sphi 0, %s35
    %s55 = sphi 0, %s55
    %s57 = sphi 0, %s55
    %s58 = sphi 0, %s57
    %s72 = sphi 0, %s58
    %s76 = sphi 0, %s76
    %s78 = sphi 0, %s76
    %s79 = sphi 0, %s78
    %s93 = sphi 0, %s79
    %s97 = sphi 0, %s97
    %s99 = sphi 0, %s97
    %s100 = sphi 0, %s99
    %s114 = sphi 0, %s100
    %s118 = sphi 0, %s118
    %s120 = sphi 0, %s118
    %s121 = sphi 0, %s120
    %s135 = sphi 0, %s121
    %s139 = sphi 0, %s139
    %s141 = sphi 0, %s139
    %s142 = sphi 0, %s141
    %s156 = sphi 0, %s142
    %s160 = sphi 0, %s160
    %s162 = sphi 0, %s160
    %s163 = sphi 0, %s162
    %s177 = sphi 0, %s163
    %s181 = sphi 0, %s181
    %s183 = sphi 0, %s181
    %s184 = sphi 0, %s183
    %s198 = sphi 0, %s184
    %s202 = sphi 0, %s202
    %s204 = sphi 0, %s202
    %s205 = sphi 0, %s204
    %s219 = sphi 0, %s205
    %s223 = sphi 0, %s223
    %s225 = sphi 0, %s223
    %s226 = sphi 0, %s225
    %s240 = sphi 0, %s226
    %s244 = sphi 0, %s244
    %s246 = sphi 0, %s244
    %s247 = sphi 0, %s246
    %s261 = sphi 0, %s247
    %s265 = sphi 0, %s265
    %s267 = sphi 0, %s265
    %s268 = sphi 0, %s267
    %s282 = sphi 0, %s268
    %s286 = sphi 0, %s286
    %s288 = sphi 0, %s286
    %s289 = sphi 0, %s288
    %s303 = sphi 0, %s289
    %s309 = sphi 0, %s311
    %s312 = sphi 0, %s309
    %s313 = sphi 0, %s312
    %s329 = sphi 0, %s313
  $region4: #{tpu_custom_call.1} parent=0 // loop_header_branch
    %24 = sbr.rel (%p22) target = $region8
  $region5: #{tpu_custom_call.1} parent=0 // loop_body
    %s26 = ssub.s32 %s21, 1
    %s27 = ssub.s32 %s21, 2
    %s28 = sadd.s32 %s21, 1
    %s29 = ssub.s32 %s21, %s28
    %p30 = scmp.eq.s32.totalorder %s29, 0
    %s32 = sadd.s32 %s31, 1
    %s33 = scalar_select %p30, %s31, %s32
    %p36 = pneg %p30
    %p37 = scmp.eq.s32.totalorder %s21, 1
    %p38 = por %p36, %p37
    %p39 = scmp.ne.s32.totalorder %s31, %s34
    %p40 = scmp.eq.s32.totalorder %s21, 0
    %p41 = por %p39, %p40
    %p42 = scmp.ne.s32.totalorder %s31, %s34
    %p43 = scmp.eq.s32.totalorder %s26, 1
    %p44 = por %p42, %p43
    %p45 = scmp.ne.s32.totalorder %s34, %s35
    %p46 = scmp.eq.s32.totalorder %s26, 0
    %p47 = por %p45, %p46
    %p48 = scmp.ne.s32.totalorder %s34, %s35
    %p49 = scmp.eq.s32.totalorder %s27, 1
    %p50 = por %p48, %p49
    %p52 = scmp.ne.s32.totalorder %s35, %s51
    %p53 = scmp.eq.s32.totalorder %s27, 0
    %p54 = por %p52, %p53
    %s56 = sadd.s32 %s55, 1
    %p59 = scmp.eq.s32.totalorder %s21, 1
    %p60 = scmp.ne.s32.totalorder %s55, %s57
    %p61 = scmp.eq.s32.totalorder %s21, 0
    %p62 = por %p60, %p61
    %p63 = scmp.ne.s32.totalorder %s55, %s57
    %p64 = scmp.eq.s32.totalorder %s26, 1
    %p65 = por %p63, %p64
    %p66 = scmp.ne.s32.totalorder %s57, %s58
    %p67 = scmp.eq.s32.totalorder %s26, 0
    %p68 = por %p66, %p67
    %p69 = scmp.ne.s32.totalorder %s57, %s58
    %p70 = scmp.eq.s32.totalorder %s27, 1
    %p71 = por %p69, %p70
    %p73 = scmp.ne.s32.totalorder %s58, %s72
    %p74 = scmp.eq.s32.totalorder %s27, 0
    %p75 = por %p73, %p74
    %s77 = sadd.s32 %s76, 1
    %p80 = scmp.eq.s32.totalorder %s21, 1
    %p81 = scmp.ne.s32.totalorder %s76, %s78
    %p82 = scmp.eq.s32.totalorder %s21, 0
    %p83 = por %p81, %p82
    %p84 = scmp.ne.s32.totalorder %s76, %s78
    %p85 = scmp.eq.s32.totalorder %s26, 1
    %p86 = por %p84, %p85
    %p87 = scmp.ne.s32.totalorder %s78, %s79
    %p88 = scmp.eq.s32.totalorder %s26, 0
    %p89 = por %p87, %p88
    %p90 = scmp.ne.s32.totalorder %s78, %s79
    %p91 = scmp.eq.s32.totalorder %s27, 1
    %p92 = por %p90, %p91
    %p94 = scmp.ne.s32.totalorder %s79, %s93
    %p95 = scmp.eq.s32.totalorder %s27, 0
    %p96 = por %p94, %p95
    %s98 = sadd.s32 %s97, 1
    %p101 = scmp.eq.s32.totalorder %s21, 1
    %p102 = scmp.ne.s32.totalorder %s97, %s99
    %p103 = scmp.eq.s32.totalorder %s21, 0
    %p104 = por %p102, %p103
    %p105 = scmp.ne.s32.totalorder %s97, %s99
    %p106 = scmp.eq.s32.totalorder %s26, 1
    %p107 = por %p105, %p106
    %p108 = scmp.ne.s32.totalorder %s99, %s100
    %p109 = scmp.eq.s32.totalorder %s26, 0
    %p110 = por %p108, %p109
    %p111 = scmp.ne.s32.totalorder %s99, %s100
    %p112 = scmp.eq.s32.totalorder %s27, 1
    %p113 = por %p111, %p112
    %p115 = scmp.ne.s32.totalorder %s100, %s114
    %p116 = scmp.eq.s32.totalorder %s27, 0
    %p117 = por %p115, %p116
    %s119 = sadd.s32 %s118, 1
    %p122 = scmp.eq.s32.totalorder %s21, 1
    %p123 = scmp.ne.s32.totalorder %s118, %s120
    %p124 = scmp.eq.s32.totalorder %s21, 0
    %p125 = por %p123, %p124
    %p126 = scmp.ne.s32.totalorder %s118, %s120
    %p127 = scmp.eq.s32.totalorder %s26, 1
    %p128 = por %p126, %p127
    %p129 = scmp.ne.s32.totalorder %s120, %s121
    %p130 = scmp.eq.s32.totalorder %s26, 0
    %p131 = por %p129, %p130
    %p132 = scmp.ne.s32.totalorder %s120, %s121
    %p133 = scmp.eq.s32.totalorder %s27, 1
    %p134 = por %p132, %p133
    %p136 = scmp.ne.s32.totalorder %s121, %s135
    %p137 = scmp.eq.s32.totalorder %s27, 0
    %p138 = por %p136, %p137
    %s140 = sadd.s32 %s139, 1
    %p143 = scmp.eq.s32.totalorder %s21, 1
    %p144 = scmp.ne.s32.totalorder %s139, %s141
    %p145 = scmp.eq.s32.totalorder %s21, 0
    %p146 = por %p144, %p145
    %p147 = scmp.ne.s32.totalorder %s139, %s141
    %p148 = scmp.eq.s32.totalorder %s26, 1
    %p149 = por %p147, %p148
    %p150 = scmp.ne.s32.totalorder %s141, %s142
    %p151 = scmp.eq.s32.totalorder %s26, 0
    %p152 = por %p150, %p151
    %p153 = scmp.ne.s32.totalorder %s141, %s142
    %p154 = scmp.eq.s32.totalorder %s27, 1
    %p155 = por %p153, %p154
    %p157 = scmp.ne.s32.totalorder %s142, %s156
    %p158 = scmp.eq.s32.totalorder %s27, 0
    %p159 = por %p157, %p158
    %s161 = sadd.s32 %s160, 1
    %p164 = scmp.eq.s32.totalorder %s21, 1
    %p165 = scmp.ne.s32.totalorder %s160, %s162
    %p166 = scmp.eq.s32.totalorder %s21, 0
    %p167 = por %p165, %p166
    %p168 = scmp.ne.s32.totalorder %s160, %s162
    %p169 = scmp.eq.s32.totalorder %s26, 1
    %p170 = por %p168, %p169
    %p171 = scmp.ne.s32.totalorder %s162, %s163
    %p172 = scmp.eq.s32.totalorder %s26, 0
    %p173 = por %p171, %p172
    %p174 = scmp.ne.s32.totalorder %s162, %s163
    %p175 = scmp.eq.s32.totalorder %s27, 1
    %p176 = por %p174, %p175
    %p178 = scmp.ne.s32.totalorder %s163, %s177
    %p179 = scmp.eq.s32.totalorder %s27, 0
    %p180 = por %p178, %p179
    %s182 = sadd.s32 %s181, 1
    %p185 = scmp.eq.s32.totalorder %s21, 1
    %p186 = scmp.ne.s32.totalorder %s181, %s183
    %p187 = scmp.eq.s32.totalorder %s21, 0
    %p188 = por %p186, %p187
    %p189 = scmp.ne.s32.totalorder %s181, %s183
    %p190 = scmp.eq.s32.totalorder %s26, 1
    %p191 = por %p189, %p190
    %p192 = scmp.ne.s32.totalorder %s183, %s184
    %p193 = scmp.eq.s32.totalorder %s26, 0
    %p194 = por %p192, %p193
    %p195 = scmp.ne.s32.totalorder %s183, %s184
    %p196 = scmp.eq.s32.totalorder %s27, 1
    %p197 = por %p195, %p196
    %p199 = scmp.ne.s32.totalorder %s184, %s198
    %p200 = scmp.eq.s32.totalorder %s27, 0
    %p201 = por %p199, %p200
    %s203 = sadd.s32 %s202, 1
    %p206 = scmp.eq.s32.totalorder %s21, 1
    %p207 = scmp.ne.s32.totalorder %s202, %s204
    %p208 = scmp.eq.s32.totalorder %s21, 0
    %p209 = por %p207, %p208
    %p210 = scmp.ne.s32.totalorder %s202, %s204
    %p211 = scmp.eq.s32.totalorder %s26, 1
    %p212 = por %p210, %p211
    %p213 = scmp.ne.s32.totalorder %s204, %s205
    %p214 = scmp.eq.s32.totalorder %s26, 0
    %p215 = por %p213, %p214
    %p216 = scmp.ne.s32.totalorder %s204, %s205
    %p217 = scmp.eq.s32.totalorder %s27, 1
    %p218 = por %p216, %p217
    %p220 = scmp.ne.s32.totalorder %s205, %s219
    %p221 = scmp.eq.s32.totalorder %s27, 0
    %p222 = por %p220, %p221
    %s224 = sadd.s32 %s223, 1
    %p227 = scmp.eq.s32.totalorder %s21, 1
    %p228 = scmp.ne.s32.totalorder %s223, %s225
    %p229 = scmp.eq.s32.totalorder %s21, 0
    %p230 = por %p228, %p229
    %p231 = scmp.ne.s32.totalorder %s223, %s225
    %p232 = scmp.eq.s32.totalorder %s26, 1
    %p233 = por %p231, %p232
    %p234 = scmp.ne.s32.totalorder %s225, %s226
    %p235 = scmp.eq.s32.totalorder %s26, 0
    %p236 = por %p234, %p235
    %p237 = scmp.ne.s32.totalorder %s225, %s226
    %p238 = scmp.eq.s32.totalorder %s27, 1
    %p239 = por %p237, %p238
    %p241 = scmp.ne.s32.totalorder %s226, %s240
    %p242 = scmp.eq.s32.totalorder %s27, 0
    %p243 = por %p241, %p242
    %s245 = sadd.s32 %s244, 1
    %p248 = scmp.eq.s32.totalorder %s21, 1
    %p249 = scmp.ne.s32.totalorder %s244, %s246
    %p250 = scmp.eq.s32.totalorder %s21, 0
    %p251 = por %p249, %p250
    %p252 = scmp.ne.s32.totalorder %s244, %s246
    %p253 = scmp.eq.s32.totalorder %s26, 1
    %p254 = por %p252, %p253
    %p255 = scmp.ne.s32.totalorder %s246, %s247
    %p256 = scmp.eq.s32.totalorder %s26, 0
    %p257 = por %p255, %p256
    %p258 = scmp.ne.s32.totalorder %s246, %s247
    %p259 = scmp.eq.s32.totalorder %s27, 1
    %p260 = por %p258, %p259
    %p262 = scmp.ne.s32.totalorder %s247, %s261
    %p263 = scmp.eq.s32.totalorder %s27, 0
    %p264 = por %p262, %p263
    %s266 = sadd.s32 %s265, 1
    %p269 = scmp.eq.s32.totalorder %s21, 1
    %p270 = scmp.ne.s32.totalorder %s265, %s267
    %p271 = scmp.eq.s32.totalorder %s21, 0
    %p272 = por %p270, %p271
    %p273 = scmp.ne.s32.totalorder %s265, %s267
    %p274 = scmp.eq.s32.totalorder %s26, 1
    %p275 = por %p273, %p274
    %p276 = scmp.ne.s32.totalorder %s267, %s268
    %p277 = scmp.eq.s32.totalorder %s26, 0
    %p278 = por %p276, %p277
    %p279 = scmp.ne.s32.totalorder %s267, %s268
    %p280 = scmp.eq.s32.totalorder %s27, 1
    %p281 = por %p279, %p280
    %p283 = scmp.ne.s32.totalorder %s268, %s282
    %p284 = scmp.eq.s32.totalorder %s27, 0
    %p285 = por %p283, %p284
    %s287 = sadd.s32 %s286, 1
    %p290 = scmp.eq.s32.totalorder %s21, 1
    %p291 = scmp.ne.s32.totalorder %s286, %s288
    %p292 = scmp.eq.s32.totalorder %s21, 0
    %p293 = por %p291, %p292
    %p294 = scmp.ne.s32.totalorder %s286, %s288
    %p295 = scmp.eq.s32.totalorder %s26, 1
    %p296 = por %p294, %p295
    %p297 = scmp.ne.s32.totalorder %s288, %s289
    %p298 = scmp.eq.s32.totalorder %s26, 0
    %p299 = por %p297, %p298
    %p300 = scmp.ne.s32.totalorder %s288, %s289
    %p301 = scmp.eq.s32.totalorder %s27, 1
    %p302 = por %p300, %p301
    %p304 = scmp.ne.s32.totalorder %s289, %s303
    %p305 = scmp.eq.s32.totalorder %s27, 0
    %p306 = por %p304, %p305
    %s307 = ssub.s32 %s21, %s28
    %p308 = scmp.eq.s32.totalorder %s307, 0
    %s310 = sadd.s32 %s309, 1
    %s311 = scalar_select %p308, %s309, %s310
    %p314 = pneg %p308
    %p315 = scmp.eq.s32.totalorder %s21, 1
    %p316 = por %p314, %p315
    %p317 = scmp.ne.s32.totalorder %s309, %s312
    %p318 = scmp.eq.s32.totalorder %s21, 0
    %p319 = por %p317, %p318
    %p320 = scmp.ne.s32.totalorder %s309, %s312
    %p321 = scmp.eq.s32.totalorder %s26, 1
    %p322 = por %p320, %p321
    %p323 = scmp.ne.s32.totalorder %s312, %s313
    %p324 = scmp.eq.s32.totalorder %s26, 0
    %p325 = por %p323, %p324
    %p326 = scmp.ne.s32.totalorder %s312, %s313
    %p327 = scmp.eq.s32.totalorder %s27, 1
    %p328 = por %p326, %p327
    %p330 = scmp.ne.s32.totalorder %s313, %s329
    %p331 = scmp.eq.s32.totalorder %s27, 0
    %p332 = por %p330, %p331
    %p333 = scmp.le.s32.totalorder 1, %s21
    %p334 = scmp.lt.s32.totalorder %s21, 3
    %p335 = pnand %p333, %p334
    %p336 = pneg %p335
    // Predicated region
    $region9: #{tpu_custom_call.1} parent=5 // pred_check
      _
    $region10: #{tpu_custom_call.1} parent=5 // pred_check_branch
      %338 = sbr.rel (%p335) target = $region12
    $region11: #{tpu_custom_call.1} parent=5 // pred_region
      %s339 = ssub.s32 %s21, 1
      // Predicated region
      $region13: #{tpu_custom_call.1} parent=11 // pred_check
        %p340 = pneg %p68
      $region14: #{tpu_custom_call.1} parent=11 // pred_check_branch
        %342 = sbr.rel (%p340) target = $region16
      $region15: #{tpu_custom_call.1} parent=11 // pred_region
        _
      $region16: #{tpu_custom_call.1} parent=11 // pred_fallthru
        _
      // Predicated region
      $region17: #{tpu_custom_call.1} parent=11 // pred_check
        %p343 = pneg %p89
      $region18: #{tpu_custom_call.1} parent=11 // pred_check_branch
        %345 = sbr.rel (%p343) target = $region20
      $region19: #{tpu_custom_call.1} parent=11 // pred_region
        _
      $region20: #{tpu_custom_call.1} parent=11 // pred_fallthru
        _
      // Predicated region
      $region21: #{tpu_custom_call.1} parent=11 // pred_check
        %p346 = pneg %p110
      $region22: #{tpu_custom_call.1} parent=11 // pred_check_branch
        %348 = sbr.rel (%p346) target = $region24
      $region23: #{tpu_custom_call.1} parent=11 // pred_region
        _
      $region24: #{tpu_custom_call.1} parent=11 // pred_fallthru
        _
      // Predicated region
      $region25: #{tpu_custom_call.1} parent=11 // pred_check
        %p349 = pneg %p131
      $region26: #{tpu_custom_call.1} parent=11 // pred_check_branch
        %351 = sbr.rel (%p349) target = $region28
      $region27: #{tpu_custom_call.1} parent=11 // pred_region
        _
      $region28: #{tpu_custom_call.1} parent=11 // pred_fallthru
        _
      // Predicated region
      $region29: #{tpu_custom_call.1} parent=11 // pred_check
        %p352 = pneg %p152
      $region30: #{tpu_custom_call.1} parent=11 // pred_check_branch
        %354 = sbr.rel (%p352) target = $region32
      $region31: #{tpu_custom_call.1} parent=11 // pred_region
        _
      $region32: #{tpu_custom_call.1} parent=11 // pred_fallthru
        _
      // Predicated region
      $region33: #{tpu_custom_call.1} parent=11 // pred_check
        %p355 = pneg %p173
      $region34: #{tpu_custom_call.1} parent=11 // pred_check_branch
        %357 = sbr.rel (%p355) target = $region36
      $region35: #{tpu_custom_call.1} parent=11 // pred_region
        _
      $region36: #{tpu_custom_call.1} parent=11 // pred_fallthru
        _
      // Predicated region
      $region37: #{tpu_custom_call.1} parent=11 // pred_check
        %p358 = pneg %p194
      $region38: #{tpu_custom_call.1} parent=11 // pred_check_branch
        %360 = sbr.rel (%p358) target = $region40
      $region39: #{tpu_custom_call.1} parent=11 // pred_region
        _
      $region40: #{tpu_custom_call.1} parent=11 // pred_fallthru
        _
      // Predicated region
      $region41: #{tpu_custom_call.1} parent=11 // pred_check
        %p361 = pneg %p215
      $region42: #{tpu_custom_call.1} parent=11 // pred_check_branch
        %363 = sbr.rel (%p361) target = $region44
      $region43: #{tpu_custom_call.1} parent=11 // pred_region
        _
      $region44: #{tpu_custom_call.1} parent=11 // pred_fallthru
        _
      // Predicated region
      $region45: #{tpu_custom_call.1} parent=11 // pred_check
        %p364 = pneg %p236
      $region46: #{tpu_custom_call.1} parent=11 // pred_check_branch
        %366 = sbr.rel (%p364) target = $region48
      $region47: #{tpu_custom_call.1} parent=11 // pred_region
        _
      $region48: #{tpu_custom_call.1} parent=11 // pred_fallthru
        _
      // Predicated region
      $region49: #{tpu_custom_call.1} parent=11 // pred_check
        %p367 = pneg %p257
      $region50: #{tpu_custom_call.1} parent=11 // pred_check_branch
        %369 = sbr.rel (%p367) target = $region52
      $region51: #{tpu_custom_call.1} parent=11 // pred_region
        _
      $region52: #{tpu_custom_call.1} parent=11 // pred_fallthru
        _
      // Predicated region
      $region53: #{tpu_custom_call.1} parent=11 // pred_check
        %p370 = pneg %p278
      $region54: #{tpu_custom_call.1} parent=11 // pred_check_branch
        %372 = sbr.rel (%p370) target = $region56
      $region55: #{tpu_custom_call.1} parent=11 // pred_region
        _
      $region56: #{tpu_custom_call.1} parent=11 // pred_fallthru
        _
      // Predicated region
      $region57: #{tpu_custom_call.1} parent=11 // pred_check
        %p373 = pneg %p299
      $region58: #{tpu_custom_call.1} parent=11 // pred_check_branch
        %375 = sbr.rel (%p373) target = $region60
      $region59: #{tpu_custom_call.1} parent=11 // pred_region
        _
      $region60: #{tpu_custom_call.1} parent=11 // pred_fallthru
        _
    $region12: #{tpu_custom_call.1} parent=5 // pred_fallthru
      _
    %p376 = scmp.lt.s32.totalorder %s21, 2
    // Predicated region
    $region61: #{tpu_custom_call.1} parent=5 // pred_check
      %p377 = pneg %p376
    $region62: #{tpu_custom_call.1} parent=5 // pred_check_branch
      %379 = sbr.rel (%p377) target = $region64
    $region63: #{tpu_custom_call.1} parent=5 // pred_region
      // Predicated region
      $region65: #{tpu_custom_call.1} parent=63 // pred_check
        %p380 = pneg %p41
      $region66: #{tpu_custom_call.1} parent=63 // pred_check_branch
        %382 = sbr.rel (%p380) target = $region68
      $region67: #{tpu_custom_call.1} parent=63 // pred_region
        %s383 = smul.u32 16, %s21
        %p384 = scmp.lt.s32.totalorder %s383, 31
        %s385 = scalar_select %p384, %s383, 31
        %s386 = smul.addr %s385, 8
        %s387 = scalar_lea.vmem %s0, %s386
        %s388 = smul.u32 16, %s21
      $region68: #{tpu_custom_call.1} parent=63 // pred_fallthru
        _
    $region64: #{tpu_custom_call.1} parent=5 // pred_fallthru
      _
    %p389 = scmp.le.s32.totalorder 1, %s21
    %p390 = scmp.lt.s32.totalorder %s21, 3
    %p391 = pnand %p389, %p390
    %p392 = pneg %p391
    // Predicated region
    $region69: #{tpu_custom_call.1} parent=5 // pred_check
      _
    $region70: #{tpu_custom_call.1} parent=5 // pred_check_branch
      %394 = sbr.rel (%p391) target = $region72
    $region71: #{tpu_custom_call.1} parent=5 // pred_region
      %s395 = ssub.s32 %s21, 1
      %s396 = smul.u32 16, %s26
      %p397 = scmp.lt.s32.totalorder %s396, 31
      %s398 = scalar_select %p397, %s396, 31
      %s399 = smul.addr %s398, 8
      %s400 = scalar_lea.vmem %s0, %s399
      %p401 = pneg %p47
      %p402 = pneg %p44
      %p403 = pneg %p68
      %p404 = pneg %p65
      %p405 = pneg %p89
      %p406 = pneg %p86
      %p407 = pneg %p110
      %p408 = pneg %p107
      %p409 = pneg %p131
      %p410 = pneg %p128
      %p411 = pneg %p152
      %p412 = pneg %p149
      %p413 = pneg %p173
      %p414 = pneg %p170
      %p415 = pneg %p194
      %p416 = pneg %p191
      %p417 = pneg %p215
      %p418 = pneg %p212
      %p419 = pneg %p236
      %p420 = pneg %p233
      %p421 = pneg %p257
      %p422 = pneg %p254
      %p423 = pneg %p278
      %p424 = pneg %p275
      %p425 = pneg %p299
      %p426 = pneg %p296
      %p427 = pneg %p325
      %p428 = pneg %p322
      %s429 = smul.u32 16, %s26
      %p430 = scmp.lt.s32.totalorder %s429, 31
      %s431 = scalar_select %p430, %s429, 31
      %s432 = smul.addr %s431, 8
      %s433 = scalar_lea.vmem %s13, %s432
      %s434 = smul.u32 16, %s26
      %p435 = scmp.lt.s32.totalorder %s434, 31
      %s436 = scalar_select %p435, %s434, 31
      %s437 = smul.addr %s436, 8
      %s438 = scalar_lea.vmem %s0, %s437
      %s439 = smul.u32 16, %s26
      %s440 = smul.u32 16, %s26
      %p441 = scmp.lt.s32.totalorder %s440, 31
      %s442 = scalar_select %p441, %s440, 31
      %s443 = smul.addr %s442, 8
      %s444 = scalar_lea.vmem %s13, %s443
      %s445 = smul.u32 16, %s26
      %v447 = vld [vmem:[%s438] sm:$0xff]
      %v448 = vld [vmem:[%s438 + $0x8] sm:$0xff]
      %v449 = vld [vmem:[%s438 + $0x10] sm:$0xff]
      %v450 = vld [vmem:[%s438 + $0x18] sm:$0xff]
      %v451 = vld [vmem:[%s438 + $0x20] sm:$0xff]
      %v452 = vld [vmem:[%s438 + $0x28] sm:$0xff]
      %v453 = vld [vmem:[%s438 + $0x30] sm:$0xff]
      %v454 = vld [vmem:[%s438 + $0x38] sm:$0xff]
      %v455 = vld [vmem:[%s438 + $0x40] sm:$0xff]
      %v456 = vld [vmem:[%s438 + $0x48] sm:$0xff]
      %v457 = vld [vmem:[%s438 + $0x50] sm:$0xff]
      %v458 = vld [vmem:[%s438 + $0x58] sm:$0xff]
      %v459 = vld [vmem:[%s438 + $0x60] sm:$0xff]
      %v460 = vld [vmem:[%s438 + $0x68] sm:$0xff]
      %v461 = vld [vmem:[%s438 + $0x70] sm:$0xff]
      %v462 = vld [vmem:[%s438 + $0x78] sm:$0xff]
      %v463 = vpack.c.bf16 %v448, %v447
      %v464 = vpack.c.bf16 %v450, %v449
      %v465 = vpack.c.bf16 %v452, %v451
      %v466 = vpack.c.bf16 %v454, %v453
      %v467 = vpack.c.bf16 %v456, %v455
      %v468 = vpack.c.bf16 %v458, %v457
      %v469 = vpack.c.bf16 %v460, %v459
      %v470 = vpack.c.bf16 %v462, %v461
      %v471 = vld [vmem:[%s1] sm:$0xff]
      %v472 = vld [vmem:[%s1 + $0x8] sm:$0xff]
      %v473 = vld [vmem:[%s1 + $0x10] sm:$0xff]
      %v474 = vld [vmem:[%s1 + $0x18] sm:$0xff]
      %v475 = vld [vmem:[%s2] sm:$0x3]
      %v477 = vlaneseq
      %v478 = vshrl.u32 %v477, 7
      %v479 = vsub.s32 0, %v478
      %v480 = vrot.slane %v475, %v479
      %v481 = vlaneseq
      %v482 = vshrl.u32 %v481, 7
      %v483 = vsub.s32 1, %v482
      %v484 = vrot.slane %v475, %v483
      %v491 = vunpack.c.l.b16 %v471
      %v492 = vunpack.c.h.b16 %v471
      %v493 = vunpack.c.l.b16 %v472
      %v494 = vunpack.c.h.b16 %v472
      %v495 = vunpack.c.l.b16 %v473
      %v496 = vunpack.c.h.b16 %v473
      %v497 = vunpack.c.l.b16 %v474
      %v498 = vunpack.c.h.b16 %v474
      %v499 = vpack.c.b16 %v493, %v491
      %v500 = vpack.c.b16 %v494, %v492
      %v501 = vpack.c.b16 %v497, %v495
      %v502 = vpack.c.b16 %v498, %v496
      %vm507 = vcmask 261120
      %v509 = vsel %vm507, %v463, 0
      %v512 = vsel %vm507, %v464, 0
      %v515 = vsel %vm507, %v465, 0
      %v518 = vsel %vm507, %v466, 0
      %v521 = vsel %vm507, %v467, 0
      %v524 = vsel %vm507, %v468, 0
      %v527 = vsel %vm507, %v469, 0
      %v530 = vsel %vm507, %v470, 0
      %532 = vmatprep.subr.bf16.mxu0 %v500
      %533 = vmatpush1.bf16.msra.mxu0 %v499
      %534 = vmatprep.subr.bf16.mxu0 %v502
      %535 = vmatpush1.bf16.msra.mxu0 %v501
      %536 = vmatprep.subr.bf16.mxu0 0
      %537 = vmatpush1.bf16.msra.mxu0 0
      %538 = vmatprep.subr.bf16.mxu0 0
      %539 = vmatpush1.bf16.msra.mxu0 0
      %540 = vmatprep.subr.bf16.mxu0 0
      %541 = vmatpush1.bf16.msra.mxu0 0
      %542 = vmatprep.subr.bf16.mxu0 0
      %543 = vmatpush1.bf16.msra.mxu0 0
      %544 = vmatprep.subr.bf16.mxu0 0
      %545 = vmatpush1.bf16.msra.mxu0 0
      %546 = vmatprep.subr.bf16.mxu0 0
      %547 = vmatpush1.bf16.msra.mxu0 0
      %548 = vmatprep.subr.bf16.mxu0 0
      %549 = vmatpush1.bf16.msra.mxu0 0
      %550 = vmatprep.subr.bf16.mxu0 0
      %551 = vmatpush1.bf16.msra.mxu0 0
      %552 = vmatprep.subr.bf16.mxu0 0
      %553 = vmatpush1.bf16.msra.mxu0 0
      %554 = vmatprep.subr.bf16.mxu0 0
      %555 = vmatpush1.bf16.msra.mxu0 0
      %556 = vmatprep.subr.bf16.mxu0 0
      %557 = vmatpush1.bf16.msra.mxu0 0
      %558 = vmatprep.subr.bf16.mxu0 0
      %559 = vmatpush1.bf16.msra.mxu0 0
      %560 = vmatprep.subr.bf16.mxu0 0
      %561 = vmatpush1.bf16.msra.mxu0 0
      %562 = vmatprep.subr.bf16.mxu0 0
      %563 = vmatpush1.bf16.msra.mxu0 0
      %564 = vmatprep.mubr.bf16.mxu0 0
      %565 = vmatmul.mubr.bf16.gmra.mrb[0].mxu0 %v509
      %v566 = vpop.f32.mrb[0].mxu0
      %v567 = vadd.f32 %v480, %v566
      %v568 = vpop.f32.mrb[0].mxu0
      %v569 = vadd.f32 %v484, %v568
      %v570 = vpop.f32.mrb[0].mxu0
      %v571 = vadd.f32 %v480, %v570
      %v572 = vpop.f32.mrb[0].mxu0
      %v573 = vadd.f32 %v484, %v572
      %574 = vmatprep.mubr.bf16.mxu0 0
      %575 = vmatmul.mubr.bf16.gmra.mrb[0].mxu0 %v512
      %v576 = vpop.f32.mrb[0].mxu0
      %v577 = vadd.f32 %v480, %v576
      %v578 = vpop.f32.mrb[0].mxu0
      %v579 = vadd.f32 %v484, %v578
      %v580 = vpop.f32.mrb[0].mxu0
      %v581 = vadd.f32 %v480, %v580
      %v582 = vpop.f32.mrb[0].mxu0
      %v583 = vadd.f32 %v484, %v582
      %584 = vmatprep.mubr.bf16.mxu0 0
      %585 = vmatmul.mubr.bf16.gmra.mrb[0].mxu0 %v515
      %v586 = vpop.f32.mrb[0].mxu0
      %v587 = vadd.f32 %v480, %v586
      %v588 = vpop.f32.mrb[0].mxu0
      %v589 = vadd.f32 %v484, %v588
      %v590 = vpop.f32.mrb[0].mxu0
      %v591 = vadd.f32 %v480, %v590
      %v592 = vpop.f32.mrb[0].mxu0
      %v593 = vadd.f32 %v484, %v592
      %594 = vmatprep.mubr.bf16.mxu0 0
      %595 = vmatmul.mubr.bf16.gmra.mrb[0].mxu0 %v518
      %v596 = vpop.f32.mrb[0].mxu0
      %v597 = vadd.f32 %v480, %v596
      %v598 = vpop.f32.mrb[0].mxu0
      %v599 = vadd.f32 %v484, %v598
      %v600 = vpop.f32.mrb[0].mxu0
      %v601 = vadd.f32 %v480, %v600
      %v602 = vpop.f32.mrb[0].mxu0
      %v603 = vadd.f32 %v484, %v602
      %604 = vmatprep.mubr.bf16.mxu0 0
      %605 = vmatmul.mubr.bf16.gmra.mrb[0].mxu0 %v521
      %v606 = vpop.f32.mrb[0].mxu0
      %v607 = vadd.f32 %v480, %v606
      %v608 = vpop.f32.mrb[0].mxu0
      %v609 = vadd.f32 %v484, %v608
      %v610 = vpop.f32.mrb[0].mxu0
      %v611 = vadd.f32 %v480, %v610
      %v612 = vpop.f32.mrb[0].mxu0
      %v613 = vadd.f32 %v484, %v612
      %614 = vmatprep.mubr.bf16.mxu0 0
      %615 = vmatmul.mubr.bf16.gmra.mrb[0].mxu0 %v524
      %v616 = vpop.f32.mrb[0].mxu0
      %v617 = vadd.f32 %v480, %v616
      %v618 = vpop.f32.mrb[0].mxu0
      %v619 = vadd.f32 %v484, %v618
      %v620 = vpop.f32.mrb[0].mxu0
      %v621 = vadd.f32 %v480, %v620
      %v622 = vpop.f32.mrb[0].mxu0
      %v623 = vadd.f32 %v484, %v622
      %624 = vmatprep.mubr.bf16.mxu0 0
      %625 = vmatmul.mubr.bf16.gmra.mrb[0].mxu0 %v527
      %v626 = vpop.f32.mrb[0].mxu0
      %v627 = vadd.f32 %v480, %v626
      %v628 = vpop.f32.mrb[0].mxu0
      %v629 = vadd.f32 %v484, %v628
      %v630 = vpop.f32.mrb[0].mxu0
      %v631 = vadd.f32 %v480, %v630
      %v632 = vpop.f32.mrb[0].mxu0
      %v633 = vadd.f32 %v484, %v632
      %634 = vmatprep.mubr.bf16.mxu0 0
      %635 = vmatmul.mubr.bf16.gmra.mrb[0].mxu0 %v530
      %v636 = vpop.f32.mrb[0].mxu0
      %v637 = vadd.f32 %v480, %v636
      %v638 = vpop.f32.mrb[0].mxu0
      %v639 = vadd.f32 %v484, %v638
      %v640 = vpop.f32.mrb[0].mxu0
      %v641 = vadd.f32 %v480, %v640
      %v642 = vpop.f32.mrb[0].mxu0
      %v643 = vadd.f32 %v484, %v642
      %644 = vdwg.mxu0
      %vm645 = vcmp.gt.f32.partialorder %v567, 0.0
      %vm646 = vcmp.gt.f32.partialorder %v569, 0.0
      %vm647 = vcmp.gt.f32.partialorder %v571, 0.0
      %vm648 = vcmp.gt.f32.partialorder %v573, 0.0
      %vm649 = vcmp.gt.f32.partialorder %v577, 0.0
      %vm650 = vcmp.gt.f32.partialorder %v579, 0.0
      %vm651 = vcmp.gt.f32.partialorder %v581, 0.0
      %vm652 = vcmp.gt.f32.partialorder %v583, 0.0
      %vm653 = vcmp.gt.f32.partialorder %v587, 0.0
      %vm654 = vcmp.gt.f32.partialorder %v589, 0.0
      %vm655 = vcmp.gt.f32.partialorder %v591, 0.0
      %vm656 = vcmp.gt.f32.partialorder %v593, 0.0
      %vm657 = vcmp.gt.f32.partialorder %v597, 0.0
      %vm658 = vcmp.gt.f32.partialorder %v599, 0.0
      %vm659 = vcmp.gt.f32.partialorder %v601, 0.0
      %vm660 = vcmp.gt.f32.partialorder %v603, 0.0
      %vm661 = vcmp.gt.f32.partialorder %v607, 0.0
      %vm662 = vcmp.gt.f32.partialorder %v609, 0.0
      %vm663 = vcmp.gt.f32.partialorder %v611, 0.0
      %vm664 = vcmp.gt.f32.partialorder %v613, 0.0
      %vm665 = vcmp.gt.f32.partialorder %v617, 0.0
      %vm666 = vcmp.gt.f32.partialorder %v619, 0.0
      %vm667 = vcmp.gt.f32.partialorder %v621, 0.0
      %vm668 = vcmp.gt.f32.partialorder %v623, 0.0
      %vm669 = vcmp.gt.f32.partialorder %v627, 0.0
      %vm670 = vcmp.gt.f32.partialorder %v629, 0.0
      %vm671 = vcmp.gt.f32.partialorder %v631, 0.0
      %vm672 = vcmp.gt.f32.partialorder %v633, 0.0
      %vm673 = vcmp.gt.f32.partialorder %v637, 0.0
      %vm674 = vcmp.gt.f32.partialorder %v639, 0.0
      %vm675 = vcmp.gt.f32.partialorder %v641, 0.0
      %vm676 = vcmp.gt.f32.partialorder %v643, 0.0
      %v677 = vmul.f32 %v567, 0.1
      %v678 = vmul.f32 %v569, 0.1
      %v679 = vmul.f32 %v571, 0.1
      %v680 = vmul.f32 %v573, 0.1
      %v681 = vmul.f32 %v577, 0.1
      %v682 = vmul.f32 %v579, 0.1
      %v683 = vmul.f32 %v581, 0.1
      %v684 = vmul.f32 %v583, 0.1
      %v685 = vmul.f32 %v587, 0.1
      %v686 = vmul.f32 %v589, 0.1
      %v687 = vmul.f32 %v591, 0.1
      %v688 = vmul.f32 %v593, 0.1
      %v689 = vmul.f32 %v597, 0.1
      %v690 = vmul.f32 %v599, 0.1
      %v691 = vmul.f32 %v601, 0.1
      %v692 = vmul.f32 %v603, 0.1
      %v693 = vmul.f32 %v607, 0.1
      %v694 = vmul.f32 %v609, 0.1
      %v695 = vmul.f32 %v611, 0.1
      %v696 = vmul.f32 %v613, 0.1
      %v697 = vmul.f32 %v617, 0.1
      %v698 = vmul.f32 %v619, 0.1
      %v699 = vmul.f32 %v621, 0.1
      %v700 = vmul.f32 %v623, 0.1
      %v701 = vmul.f32 %v627, 0.1
      %v702 = vmul.f32 %v629, 0.1
      %v703 = vmul.f32 %v631, 0.1
      %v704 = vmul.f32 %v633, 0.1
      %v705 = vmul.f32 %v637, 0.1
      %v706 = vmul.f32 %v639, 0.1
      %v707 = vmul.f32 %v641, 0.1
      %v708 = vmul.f32 %v643, 0.1
      %v709 = vsel %vm645, %v567, %v677
      %v710 = vsel %vm646, %v569, %v678
      %v711 = vsel %vm647, %v571, %v679
      %v712 = vsel %vm648, %v573, %v680
      %v713 = vsel %vm649, %v577, %v681
      %v714 = vsel %vm650, %v579, %v682
      %v715 = vsel %vm651, %v581, %v683
      %v716 = vsel %vm652, %v583, %v684
      %v717 = vsel %vm653, %v587, %v685
      %v718 = vsel %vm654, %v589, %v686
      %v719 = vsel %vm655, %v591, %v687
      %v720 = vsel %vm656, %v593, %v688
      %v721 = vsel %vm657, %v597, %v689
      %v722 = vsel %vm658, %v599, %v690
      %v723 = vsel %vm659, %v601, %v691
      %v724 = vsel %vm660, %v603, %v692
      %v725 = vsel %vm661, %v607, %v693
      %v726 = vsel %vm662, %v609, %v694
      %v727 = vsel %vm663, %v611, %v695
      %v728 = vsel %vm664, %v613, %v696
      %v729 = vsel %vm665, %v617, %v697
      %v730 = vsel %vm666, %v619, %v698
      %v731 = vsel %vm667, %v621, %v699
      %v732 = vsel %vm668, %v623, %v700
      %v733 = vsel %vm669, %v627, %v701
      %v734 = vsel %vm670, %v629, %v702
      %v735 = vsel %vm671, %v631, %v703
      %v736 = vsel %vm672, %v633, %v704
      %v737 = vsel %vm673, %v637, %v705
      %v738 = vsel %vm674, %v639, %v706
      %v739 = vsel %vm675, %v641, %v707
      %v740 = vsel %vm676, %v643, %v708
      %v741 = vpack.c.bf16 %v711, %v709
      %v742 = vpack.c.bf16 %v712, %v710
      %v743 = vpack.c.bf16 %v715, %v713
      %v744 = vpack.c.bf16 %v716, %v714
      %v745 = vpack.c.bf16 %v719, %v717
      %v746 = vpack.c.bf16 %v720, %v718
      %v747 = vpack.c.bf16 %v723, %v721
      %v748 = vpack.c.bf16 %v724, %v722
      %v749 = vpack.c.bf16 %v727, %v725
      %v750 = vpack.c.bf16 %v728, %v726
      %v751 = vpack.c.bf16 %v731, %v729
      %v752 = vpack.c.bf16 %v732, %v730
      %v753 = vpack.c.bf16 %v735, %v733
      %v754 = vpack.c.bf16 %v736, %v734
      %v755 = vpack.c.bf16 %v739, %v737
      %v756 = vpack.c.bf16 %v740, %v738
      %v757 = vld [vmem:[%s3] sm:$0xf]
      %v758 = vld [vmem:[%s3 + $0x4] sm:$0xf]
      %v759 = vld [vmem:[%s3 + $0x8] sm:$0xf]
      %v760 = vld [vmem:[%s3 + $0xc] sm:$0xf]
      %v761 = vld [vmem:[%s3 + $0x10] sm:$0xf]
      %v762 = vld [vmem:[%s3 + $0x14] sm:$0xf]
      %v763 = vld [vmem:[%s3 + $0x18] sm:$0xf]
      %v764 = vld [vmem:[%s3 + $0x1c] sm:$0xf]
      %v765 = vld [vmem:[%s3 + $0x20] sm:$0xf]
      %v766 = vld [vmem:[%s3 + $0x24] sm:$0xf]
      %v767 = vld [vmem:[%s3 + $0x28] sm:$0xf]
      %v768 = vld [vmem:[%s3 + $0x2c] sm:$0xf]
      %v769 = vld [vmem:[%s3 + $0x30] sm:$0xf]
      %v770 = vld [vmem:[%s3 + $0x34] sm:$0xf]
      %v771 = vld [vmem:[%s3 + $0x38] sm:$0xf]
      %v772 = vld [vmem:[%s3 + $0x3c] sm:$0xf]
      %v773 = vld [vmem:[%s3 + $0x40] sm:$0xf]
      %v774 = vld [vmem:[%s3 + $0x44] sm:$0xf]
      %v775 = vld [vmem:[%s3 + $0x48] sm:$0xf]
      %v776 = vld [vmem:[%s3 + $0x4c] sm:$0xf]
      %v777 = vld [vmem:[%s3 + $0x50] sm:$0xf]
      %v778 = vld [vmem:[%s3 + $0x54] sm:$0xf]
      %v779 = vld [vmem:[%s3 + $0x58] sm:$0xf]
      %v780 = vld [vmem:[%s3 + $0x5c] sm:$0xf]
      %v781 = vld [vmem:[%s3 + $0x60] sm:$0xf]
      %v782 = vld [vmem:[%s3 + $0x64] sm:$0xf]
      %v783 = vld [vmem:[%s3 + $0x68] sm:$0xf]
      %v784 = vld [vmem:[%s3 + $0x6c] sm:$0xf]
      %v785 = vld [vmem:[%s3 + $0x70] sm:$0xf]
      %v786 = vld [vmem:[%s3 + $0x74] sm:$0xf]
      %v787 = vld [vmem:[%s3 + $0x78] sm:$0xf]
      %v788 = vld [vmem:[%s3 + $0x7c] sm:$0xf]
      %v789 = vld [vmem:[%s4] sm:$0x1]
      %v791 = vlaneseq
      %v792 = vshrl.u32 %v791, 7
      %v793 = vsub.s32 0, %v792
      %v794 = vrot.slane %v789, %v793
      %v828 = vunpack.c.l.b16 %v757
      %v829 = vunpack.c.l.b16 %v758
      %v830 = vunpack.c.l.b16 %v759
      %v831 = vunpack.c.l.b16 %v760
      %v832 = vunpack.c.l.b16 %v761
      %v833 = vunpack.c.l.b16 %v762
      %v834 = vunpack.c.l.b16 %v763
      %v835 = vunpack.c.l.b16 %v764
      %v836 = vunpack.c.l.b16 %v765
      %v837 = vunpack.c.l.b16 %v766
      %v838 = vunpack.c.l.b16 %v767
      %v839 = vunpack.c.l.b16 %v768
      %v840 = vunpack.c.l.b16 %v769
      %v841 = vunpack.c.l.b16 %v770
      %v842 = vunpack.c.l.b16 %v771
      %v843 = vunpack.c.l.b16 %v772
      %v844 = vunpack.c.l.b16 %v773
      %v845 = vunpack.c.l.b16 %v774
      %v846 = vunpack.c.l.b16 %v775
      %v847 = vunpack.c.l.b16 %v776
      %v848 = vunpack.c.l.b16 %v777
      %v849 = vunpack.c.l.b16 %v778
      %v850 = vunpack.c.l.b16 %v779
      %v851 = vunpack.c.l.b16 %v780
      %v852 = vunpack.c.l.b16 %v781
      %v853 = vunpack.c.l.b16 %v782
      %v854 = vunpack.c.l.b16 %v783
      %v855 = vunpack.c.l.b16 %v784
      %v856 = vunpack.c.l.b16 %v785
      %v857 = vunpack.c.l.b16 %v786
      %v858 = vunpack.c.l.b16 %v787
      %v859 = vunpack.c.l.b16 %v788
      %v860 = vpack.c.b16 %v829, %v828
      %v861 = vpack.c.b16 %v831, %v830
      %v862 = vpack.c.b16 %v833, %v832
      %v863 = vpack.c.b16 %v835, %v834
      %v864 = vpack.c.b16 %v837, %v836
      %v865 = vpack.c.b16 %v839, %v838
      %v866 = vpack.c.b16 %v841, %v840
      %v867 = vpack.c.b16 %v843, %v842
      %v868 = vpack.c.b16 %v845, %v844
      %v869 = vpack.c.b16 %v847, %v846
      %v870 = vpack.c.b16 %v849, %v848
      %v871 = vpack.c.b16 %v851, %v850
      %v872 = vpack.c.b16 %v853, %v852
      %v873 = vpack.c.b16 %v855, %v854
      %v874 = vpack.c.b16 %v857, %v856
      %v875 = vpack.c.b16 %v859, %v858
      %892 = vmatprep.subr.bf16.mxu0 0
      %893 = vmatpush1.bf16.msra.mxu0 %v860
      %894 = vmatprep.subr.bf16.mxu0 0
      %895 = vmatpush1.bf16.msra.mxu0 %v861
      %896 = vmatprep.subr.bf16.mxu0 0
      %897 = vmatpush1.bf16.msra.mxu0 %v862
      %898 = vmatprep.subr.bf16.mxu0 0
      %899 = vmatpush1.bf16.msra.mxu0 %v863
      %900 = vmatprep.subr.bf16.mxu0 0
      %901 = vmatpush1.bf16.msra.mxu0 %v864
      %902 = vmatprep.subr.bf16.mxu0 0
      %903 = vmatpush1.bf16.msra.mxu0 %v865
      %904 = vmatprep.subr.bf16.mxu0 0
      %905 = vmatpush1.bf16.msra.mxu0 %v866
      %906 = vmatprep.subr.bf16.mxu0 0
      %907 = vmatpush1.bf16.msra.mxu0 %v867
      %908 = vmatprep.subr.bf16.mxu0 0
      %909 = vmatpush1.bf16.msra.mxu0 %v868
      %910 = vmatprep.subr.bf16.mxu0 0
      %911 = vmatpush1.bf16.msra.mxu0 %v869
      %912 = vmatprep.subr.bf16.mxu0 0
      %913 = vmatpush1.bf16.msra.mxu0 %v870
      %914 = vmatprep.subr.bf16.mxu0 0
      %915 = vmatpush1.bf16.msra.mxu0 %v871
      %916 = vmatprep.subr.bf16.mxu0 0
      %917 = vmatpush1.bf16.msra.mxu0 %v872
      %918 = vmatprep.subr.bf16.mxu0 0
      %919 = vmatpush1.bf16.msra.mxu0 %v873
      %920 = vmatprep.subr.bf16.mxu0 0
      %921 = vmatpush1.bf16.msra.mxu0 %v874
      %922 = vmatprep.subr.bf16.mxu0 0
      %923 = vmatpush1.bf16.msra.mxu0 %v875
      %924 = vmatprep.mubr.bf16.mxu0 %v742
      %925 = vmatmul.mubr.bf16.gmra.mrb[0].mxu0 %v741
      %v926 = vpop.f32.mrb[0].mxu0
      %v927 = vadd.f32 %v794, %v926
      %v928 = vpop.f32.mrb[0].mxu0
      %v929 = vpop.f32.mrb[0].mxu0
      %v930 = vadd.f32 %v794, %v929
      %v931 = vpop.f32.mrb[0].mxu0
      %932 = vmatprep.mubr.bf16.mxu0 %v744
      %933 = vmatmul.mubr.bf16.gmra.mrb[0].mxu0 %v743
      %v934 = vpop.f32.mrb[0].mxu0
      %v935 = vadd.f32 %v794, %v934
      %v936 = vpop.f32.mrb[0].mxu0
      %v937 = vpop.f32.mrb[0].mxu0
      %v938 = vadd.f32 %v794, %v937
      %v939 = vpop.f32.mrb[0].mxu0
      %940 = vmatprep.mubr.bf16.mxu0 %v746
      %941 = vmatmul.mubr.bf16.gmra.mrb[0].mxu0 %v745
      %v942 = vpop.f32.mrb[0].mxu0
      %v943 = vadd.f32 %v794, %v942
      %v944 = vpop.f32.mrb[0].mxu0
      %v945 = vpop.f32.mrb[0].mxu0
      %v946 = vadd.f32 %v794, %v945
      %v947 = vpop.f32.mrb[0].mxu0
      %948 = vmatprep.mubr.bf16.mxu0 %v748
      %949 = vmatmul.mubr.bf16.gmra.mrb[0].mxu0 %v747
      %v950 = vpop.f32.mrb[0].mxu0
      %v951 = vadd.f32 %v794, %v950
      %v952 = vpop.f32.mrb[0].mxu0
      %v953 = vpop.f32.mrb[0].mxu0
      %v954 = vadd.f32 %v794, %v953
      %v955 = vpop.f32.mrb[0].mxu0
      %956 = vmatprep.mubr.bf16.mxu0 %v750
      %957 = vmatmul.mubr.bf16.gmra.mrb[0].mxu0 %v749
      %v958 = vpop.f32.mrb[0].mxu0
      %v959 = vadd.f32 %v794, %v958
      %v960 = vpop.f32.mrb[0].mxu0
      %v961 = vpop.f32.mrb[0].mxu0
      %v962 = vadd.f32 %v794, %v961
      %v963 = vpop.f32.mrb[0].mxu0
      %964 = vmatprep.mubr.bf16.mxu0 %v752
      %965 = vmatmul.mubr.bf16.gmra.mrb[0].mxu0 %v751
      %v966 = vpop.f32.mrb[0].mxu0
      %v967 = vadd.f32 %v794, %v966
      %v968 = vpop.f32.mrb[0].mxu0
      %v969 = vpop.f32.mrb[0].mxu0
      %v970 = vadd.f32 %v794, %v969
      %v971 = vpop.f32.mrb[0].mxu0
      %972 = vmatprep.mubr.bf16.mxu0 %v754
      %973 = vmatmul.mubr.bf16.gmra.mrb[0].mxu0 %v753
      %v974 = vpop.f32.mrb[0].mxu0
      %v975 = vadd.f32 %v794, %v974
      %v976 = vpop.f32.mrb[0].mxu0
      %v977 = vpop.f32.mrb[0].mxu0
      %v978 = vadd.f32 %v794, %v977
      %v979 = vpop.f32.mrb[0].mxu0
      %980 = vmatprep.mubr.bf16.mxu0 %v756
      %981 = vmatmul.mubr.bf16.gmra.mrb[0].mxu0 %v755
      %v982 = vpop.f32.mrb[0].mxu0
      %v983 = vadd.f32 %v794, %v982
      %v984 = vpop.f32.mrb[0].mxu0
      %v985 = vpop.f32.mrb[0].mxu0
      %v986 = vadd.f32 %v794, %v985
      %v987 = vpop.f32.mrb[0].mxu0
      %988 = vdwg.mxu0
      %vm989 = vcmp.gt.f32.partialorder %v927, 0.0
      %vm990 = vcmp.gt.f32.partialorder %v930, 0.0
      %vm991 = vcmp.gt.f32.partialorder %v935, 0.0
      %vm992 = vcmp.gt.f32.partialorder %v938, 0.0
      %vm993 = vcmp.gt.f32.partialorder %v943, 0.0
      %vm994 = vcmp.gt.f32.partialorder %v946, 0.0
      %vm995 = vcmp.gt.f32.partialorder %v951, 0.0
      %vm996 = vcmp.gt.f32.partialorder %v954, 0.0
      %vm997 = vcmp.gt.f32.partialorder %v959, 0.0
      %vm998 = vcmp.gt.f32.partialorder %v962, 0.0
      %vm999 = vcmp.gt.f32.partialorder %v967, 0.0
      %vm1000 = vcmp.gt.f32.partialorder %v970, 0.0
      %vm1001 = vcmp.gt.f32.partialorder %v975, 0.0
      %vm1002 = vcmp.gt.f32.partialorder %v978, 0.0
      %vm1003 = vcmp.gt.f32.partialorder %v983, 0.0
      %vm1004 = vcmp.gt.f32.partialorder %v986, 0.0
      %v1005 = vmul.f32 %v927, 0.1
      %v1006 = vmul.f32 %v930, 0.1
      %v1007 = vmul.f32 %v935, 0.1
      %v1008 = vmul.f32 %v938, 0.1
      %v1009 = vmul.f32 %v943, 0.1
      %v1010 = vmul.f32 %v946, 0.1
      %v1011 = vmul.f32 %v951, 0.1
      %v1012 = vmul.f32 %v954, 0.1
      %v1013 = vmul.f32 %v959, 0.1
      %v1014 = vmul.f32 %v962, 0.1
      %v1015 = vmul.f32 %v967, 0.1
      %v1016 = vmul.f32 %v970, 0.1
      %v1017 = vmul.f32 %v975, 0.1
      %v1018 = vmul.f32 %v978, 0.1
      %v1019 = vmul.f32 %v983, 0.1
      %v1020 = vmul.f32 %v986, 0.1
      %v1021 = vsel %vm989, %v927, %v1005
      %v1022 = vsel %vm990, %v930, %v1006
      %v1023 = vsel %vm991, %v935, %v1007
      %v1024 = vsel %vm992, %v938, %v1008
      %v1025 = vsel %vm993, %v943, %v1009
      %v1026 = vsel %vm994, %v946, %v1010
      %v1027 = vsel %vm995, %v951, %v1011
      %v1028 = vsel %vm996, %v954, %v1012
      %v1029 = vsel %vm997, %v959, %v1013
      %v1030 = vsel %vm998, %v962, %v1014
      %v1031 = vsel %vm999, %v967, %v1015
      %v1032 = vsel %vm1000, %v970, %v1016
      %v1033 = vsel %vm1001, %v975, %v1017
      %v1034 = vsel %vm1002, %v978, %v1018
      %v1035 = vsel %vm1003, %v983, %v1019
      %v1036 = vsel %vm1004, %v986, %v1020
      %v1037 = vpack.c.bf16 %v1022, %v1021
      %v1038 = vpack.c.bf16 %v1024, %v1023
      %v1039 = vpack.c.bf16 %v1026, %v1025
      %v1040 = vpack.c.bf16 %v1028, %v1027
      %v1041 = vpack.c.bf16 %v1030, %v1029
      %v1042 = vpack.c.bf16 %v1032, %v1031
      %v1043 = vpack.c.bf16 %v1034, %v1033
      %v1044 = vpack.c.bf16 %v1036, %v1035
      %v1045 = vld [vmem:[%s5] sm:$0xf]
      %v1046 = vld [vmem:[%s5 + $0x4] sm:$0xf]
      %v1047 = vld [vmem:[%s5 + $0x8] sm:$0xf]
      %v1048 = vld [vmem:[%s5 + $0xc] sm:$0xf]
      %v1049 = vld [vmem:[%s5 + $0x10] sm:$0xf]
      %v1050 = vld [vmem:[%s5 + $0x14] sm:$0xf]
      %v1051 = vld [vmem:[%s5 + $0x18] sm:$0xf]
      %v1052 = vld [vmem:[%s5 + $0x1c] sm:$0xf]
      %v1053 = vld [vmem:[%s5 + $0x20] sm:$0xf]
      %v1054 = vld [vmem:[%s5 + $0x24] sm:$0xf]
      %v1055 = vld [vmem:[%s5 + $0x28] sm:$0xf]
      %v1056 = vld [vmem:[%s5 + $0x2c] sm:$0xf]
      %v1057 = vld [vmem:[%s5 + $0x30] sm:$0xf]
      %v1058 = vld [vmem:[%s5 + $0x34] sm:$0xf]
      %v1059 = vld [vmem:[%s5 + $0x38] sm:$0xf]
      %v1060 = vld [vmem:[%s5 + $0x3c] sm:$0xf]
      %v1061 = vld [vmem:[%s6] sm:$0x1]
      %v1063 = vlaneseq
      %v1064 = vshrl.u32 %v1063, 7
      %v1065 = vsub.s32 0, %v1064
      %v1066 = vrot.slane %v1061, %v1065
      %v1084 = vunpack.c.l.b16 %v1045
      %v1085 = vunpack.c.l.b16 %v1046
      %v1086 = vunpack.c.l.b16 %v1047
      %v1087 = vunpack.c.l.b16 %v1048
      %v1088 = vunpack.c.l.b16 %v1049
      %v1089 = vunpack.c.l.b16 %v1050
      %v1090 = vunpack.c.l.b16 %v1051
      %v1091 = vunpack.c.l.b16 %v1052
      %v1092 = vunpack.c.l.b16 %v1053
      %v1093 = vunpack.c.l.b16 %v1054
      %v1094 = vunpack.c.l.b16 %v1055
      %v1095 = vunpack.c.l.b16 %v1056
      %v1096 = vunpack.c.l.b16 %v1057
      %v1097 = vunpack.c.l.b16 %v1058
      %v1098 = vunpack.c.l.b16 %v1059
      %v1099 = vunpack.c.l.b16 %v1060
      %v1100 = vpack.c.b16 %v1085, %v1084
      %v1101 = vpack.c.b16 %v1087, %v1086
      %v1102 = vpack.c.b16 %v1089, %v1088
      %v1103 = vpack.c.b16 %v1091, %v1090
      %v1104 = vpack.c.b16 %v1093, %v1092
      %v1105 = vpack.c.b16 %v1095, %v1094
      %v1106 = vpack.c.b16 %v1097, %v1096
      %v1107 = vpack.c.b16 %v1099, %v1098
      %1116 = vmatprep.subr.bf16.mxu0 0
      %1117 = vmatpush1.bf16.msra.mxu0 %v1100
      %1118 = vmatprep.subr.bf16.mxu0 0
      %1119 = vmatpush1.bf16.msra.mxu0 %v1101
      %1120 = vmatprep.subr.bf16.mxu0 0
      %1121 = vmatpush1.bf16.msra.mxu0 %v1102
      %1122 = vmatprep.subr.bf16.mxu0 0
      %1123 = vmatpush1.bf16.msra.mxu0 %v1103
      %1124 = vmatprep.subr.bf16.mxu0 0
      %1125 = vmatpush1.bf16.msra.mxu0 %v1104
      %1126 = vmatprep.subr.bf16.mxu0 0
      %1127 = vmatpush1.bf16.msra.mxu0 %v1105
      %1128 = vmatprep.subr.bf16.mxu0 0
      %1129 = vmatpush1.bf16.msra.mxu0 %v1106
      %1130 = vmatprep.subr.bf16.mxu0 0
      %1131 = vmatpush1.bf16.msra.mxu0 %v1107
      %1132 = vmatprep.subr.bf16.mxu0 0
      %1133 = vmatpush1.bf16.msra.mxu0 0
      %1134 = vmatprep.subr.bf16.mxu0 0
      %1135 = vmatpush1.bf16.msra.mxu0 0
      %1136 = vmatprep.subr.bf16.mxu0 0
      %1137 = vmatpush1.bf16.msra.mxu0 0
      %1138 = vmatprep.subr.bf16.mxu0 0
      %1139 = vmatpush1.bf16.msra.mxu0 0
      %1140 = vmatprep.subr.bf16.mxu0 0
      %1141 = vmatpush1.bf16.msra.mxu0 0
      %1142 = vmatprep.subr.bf16.mxu0 0
      %1143 = vmatpush1.bf16.msra.mxu0 0
      %1144 = vmatprep.subr.bf16.mxu0 0
      %1145 = vmatpush1.bf16.msra.mxu0 0
      %1146 = vmatprep.subr.bf16.mxu0 0
      %1147 = vmatpush1.bf16.msra.mxu0 0
      %1148 = vmatprep.mubr.bf16.mxu0 0
      %1149 = vmatmul.mubr.bf16.gmra.mrb[0].mxu0 %v1037
      %v1150 = vpop.f32.mrb[0].mxu0
      %v1151 = vadd.f32 %v1066, %v1150
      %v1152 = vpop.f32.mrb[0].mxu0
      %v1153 = vpop.f32.mrb[0].mxu0
      %v1154 = vadd.f32 %v1066, %v1153
      %v1155 = vpop.f32.mrb[0].mxu0
      %1156 = vmatprep.mubr.bf16.mxu0 0
      %1157 = vmatmul.mubr.bf16.gmra.mrb[0].mxu0 %v1038
      %v1158 = vpop.f32.mrb[0].mxu0
      %v1159 = vadd.f32 %v1066, %v1158
      %v1160 = vpop.f32.mrb[0].mxu0
      %v1161 = vpop.f32.mrb[0].mxu0
      %v1162 = vadd.f32 %v1066, %v1161
      %v1163 = vpop.f32.mrb[0].mxu0
      %1164 = vmatprep.mubr.bf16.mxu0 0
      %1165 = vmatmul.mubr.bf16.gmra.mrb[0].mxu0 %v1039
      %v1166 = vpop.f32.mrb[0].mxu0
      %v1167 = vadd.f32 %v1066, %v1166
      %v1168 = vpop.f32.mrb[0].mxu0
      %v1169 = vpop.f32.mrb[0].mxu0
      %v1170 = vadd.f32 %v1066, %v1169
      %v1171 = vpop.f32.mrb[0].mxu0
      %1172 = vmatprep.mubr.bf16.mxu0 0
      %1173 = vmatmul.mubr.bf16.gmra.mrb[0].mxu0 %v1040
      %v1174 = vpop.f32.mrb[0].mxu0
      %v1175 = vadd.f32 %v1066, %v1174
      %v1176 = vpop.f32.mrb[0].mxu0
      %v1177 = vpop.f32.mrb[0].mxu0
      %v1178 = vadd.f32 %v1066, %v1177
      %v1179 = vpop.f32.mrb[0].mxu0
      %1180 = vmatprep.mubr.bf16.mxu0 0
      %1181 = vmatmul.mubr.bf16.gmra.mrb[0].mxu0 %v1041
      %v1182 = vpop.f32.mrb[0].mxu0
      %v1183 = vadd.f32 %v1066, %v1182
      %v1184 = vpop.f32.mrb[0].mxu0
      %v1185 = vpop.f32.mrb[0].mxu0
      %v1186 = vadd.f32 %v1066, %v1185
      %v1187 = vpop.f32.mrb[0].mxu0
      %1188 = vmatprep.mubr.bf16.mxu0 0
      %1189 = vmatmul.mubr.bf16.gmra.mrb[0].mxu0 %v1042
      %v1190 = vpop.f32.mrb[0].mxu0
      %v1191 = vadd.f32 %v1066, %v1190
      %v1192 = vpop.f32.mrb[0].mxu0
      %v1193 = vpop.f32.mrb[0].mxu0
      %v1194 = vadd.f32 %v1066, %v1193
      %v1195 = vpop.f32.mrb[0].mxu0
      %1196 = vmatprep.mubr.bf16.mxu0 0
      %1197 = vmatmul.mubr.bf16.gmra.mrb[0].mxu0 %v1043
      %v1198 = vpop.f32.mrb[0].mxu0
      %v1199 = vadd.f32 %v1066, %v1198
      %v1200 = vpop.f32.mrb[0].mxu0
      %v1201 = vpop.f32.mrb[0].mxu0
      %v1202 = vadd.f32 %v1066, %v1201
      %v1203 = vpop.f32.mrb[0].mxu0
      %1204 = vmatprep.mubr.bf16.mxu0 0
      %1205 = vmatmul.mubr.bf16.gmra.mrb[0].mxu0 %v1044
      %v1206 = vpop.f32.mrb[0].mxu0
      %v1207 = vadd.f32 %v1066, %v1206
      %v1208 = vpop.f32.mrb[0].mxu0
      %v1209 = vpop.f32.mrb[0].mxu0
      %v1210 = vadd.f32 %v1066, %v1209
      %v1211 = vpop.f32.mrb[0].mxu0
      %1212 = vdwg.mxu0
      %vm1213 = vcmp.gt.f32.partialorder %v1151, 0.0
      %vm1214 = vcmp.gt.f32.partialorder %v1154, 0.0
      %vm1215 = vcmp.gt.f32.partialorder %v1159, 0.0
      %vm1216 = vcmp.gt.f32.partialorder %v1162, 0.0
      %vm1217 = vcmp.gt.f32.partialorder %v1167, 0.0
      %vm1218 = vcmp.gt.f32.partialorder %v1170, 0.0
      %vm1219 = vcmp.gt.f32.partialorder %v1175, 0.0
      %vm1220 = vcmp.gt.f32.partialorder %v1178, 0.0
      %vm1221 = vcmp.gt.f32.partialorder %v1183, 0.0
      %vm1222 = vcmp.gt.f32.partialorder %v1186, 0.0
      %vm1223 = vcmp.gt.f32.partialorder %v1191, 0.0
      %vm1224 = vcmp.gt.f32.partialorder %v1194, 0.0
      %vm1225 = vcmp.gt.f32.partialorder %v1199, 0.0
      %vm1226 = vcmp.gt.f32.partialorder %v1202, 0.0
      %vm1227 = vcmp.gt.f32.partialorder %v1207, 0.0
      %vm1228 = vcmp.gt.f32.partialorder %v1210, 0.0
      %v1229 = vmul.f32 %v1151, 0.1
      %v1230 = vmul.f32 %v1154, 0.1
      %v1231 = vmul.f32 %v1159, 0.1
      %v1232 = vmul.f32 %v1162, 0.1
      %v1233 = vmul.f32 %v1167, 0.1
      %v1234 = vmul.f32 %v1170, 0.1
      %v1235 = vmul.f32 %v1175, 0.1
      %v1236 = vmul.f32 %v1178, 0.1
      %v1237 = vmul.f32 %v1183, 0.1
      %v1238 = vmul.f32 %v1186, 0.1
      %v1239 = vmul.f32 %v1191, 0.1
      %v1240 = vmul.f32 %v1194, 0.1
      %v1241 = vmul.f32 %v1199, 0.1
      %v1242 = vmul.f32 %v1202, 0.1
      %v1243 = vmul.f32 %v1207, 0.1
      %v1244 = vmul.f32 %v1210, 0.1
      %v1245 = vsel %vm1213, %v1151, %v1229
      %v1246 = vsel %vm1214, %v1154, %v1230
      %v1247 = vsel %vm1215, %v1159, %v1231
      %v1248 = vsel %vm1216, %v1162, %v1232
      %v1249 = vsel %vm1217, %v1167, %v1233
      %v1250 = vsel %vm1218, %v1170, %v1234
      %v1251 = vsel %vm1219, %v1175, %v1235
      %v1252 = vsel %vm1220, %v1178, %v1236
      %v1253 = vsel %vm1221, %v1183, %v1237
      %v1254 = vsel %vm1222, %v1186, %v1238
      %v1255 = vsel %vm1223, %v1191, %v1239
      %v1256 = vsel %vm1224, %v1194, %v1240
      %v1257 = vsel %vm1225, %v1199, %v1241
      %v1258 = vsel %vm1226, %v1202, %v1242
      %v1259 = vsel %vm1227, %v1207, %v1243
      %v1260 = vsel %vm1228, %v1210, %v1244
      %v1261 = vpack.c.bf16 %v1246, %v1245
      %v1262 = vpack.c.bf16 %v1248, %v1247
      %v1263 = vpack.c.bf16 %v1250, %v1249
      %v1264 = vpack.c.bf16 %v1252, %v1251
      %v1265 = vpack.c.bf16 %v1254, %v1253
      %v1266 = vpack.c.bf16 %v1256, %v1255
      %v1267 = vpack.c.bf16 %v1258, %v1257
      %v1268 = vpack.c.bf16 %v1260, %v1259
      %v1269 = vld [vmem:[%s7] sm:$0xff]
      %v1270 = vld [vmem:[%s7 + $0x8] sm:$0xff]
      %v1271 = vld [vmem:[%s7 + $0x10] sm:$0xff]
      %v1272 = vld [vmem:[%s7 + $0x18] sm:$0xff]
      %v1273 = vld [vmem:[%s7 + $0x20] sm:$0xff]
      %v1274 = vld [vmem:[%s7 + $0x28] sm:$0xff]
      %v1275 = vld [vmem:[%s7 + $0x30] sm:$0xff]
      %v1276 = vld [vmem:[%s7 + $0x38] sm:$0xff]
      %v1277 = vld [vmem:[%s8] sm:$0x3]
      %v1279 = vlaneseq
      %v1280 = vshrl.u32 %v1279, 7
      %v1281 = vsub.s32 0, %v1280
      %v1282 = vrot.slane %v1277, %v1281
      %v1283 = vlaneseq
      %v1284 = vshrl.u32 %v1283, 7
      %v1285 = vsub.s32 1, %v1284
      %v1286 = vrot.slane %v1277, %v1285
      %v1297 = vunpack.c.l.b16 %v1269
      %v1298 = vunpack.c.h.b16 %v1269
      %v1299 = vunpack.c.l.b16 %v1270
      %v1300 = vunpack.c.h.b16 %v1270
      %v1301 = vunpack.c.l.b16 %v1271
      %v1302 = vunpack.c.h.b16 %v1271
      %v1303 = vunpack.c.l.b16 %v1272
      %v1304 = vunpack.c.h.b16 %v1272
      %v1305 = vunpack.c.l.b16 %v1273
      %v1306 = vunpack.c.h.b16 %v1273
      %v1307 = vunpack.c.l.b16 %v1274
      %v1308 = vunpack.c.h.b16 %v1274
      %v1309 = vunpack.c.l.b16 %v1275
      %v1310 = vunpack.c.h.b16 %v1275
      %v1311 = vunpack.c.l.b16 %v1276
      %v1312 = vunpack.c.h.b16 %v1276
      %v1313 = vpack.c.b16 %v1299, %v1297
      %v1314 = vpack.c.b16 %v1300, %v1298
      %v1315 = vpack.c.b16 %v1303, %v1301
      %v1316 = vpack.c.b16 %v1304, %v1302
      %v1317 = vpack.c.b16 %v1307, %v1305
      %v1318 = vpack.c.b16 %v1308, %v1306
      %v1319 = vpack.c.b16 %v1311, %v1309
      %v1320 = vpack.c.b16 %v1312, %v1310
      %vm1329 = vcmask 523264
      %v1331 = vsel %vm1329, %v1261, 0
      %v1334 = vsel %vm1329, %v1262, 0
      %v1337 = vsel %vm1329, %v1263, 0
      %v1340 = vsel %vm1329, %v1264, 0
      %v1343 = vsel %vm1329, %v1265, 0
      %v1346 = vsel %vm1329, %v1266, 0
      %v1349 = vsel %vm1329, %v1267, 0
      %v1352 = vsel %vm1329, %v1268, 0
      %1354 = vmatprep.subr.bf16.mxu0 %v1314
      %1355 = vmatpush1.bf16.msra.mxu0 %v1313
      %1356 = vmatprep.subr.bf16.mxu0 %v1316
      %1357 = vmatpush1.bf16.msra.mxu0 %v1315
      %1358 = vmatprep.subr.bf16.mxu0 %v1318
      %1359 = vmatpush1.bf16.msra.mxu0 %v1317
      %1360 = vmatprep.subr.bf16.mxu0 %v1320
      %1361 = vmatpush1.bf16.msra.mxu0 %v1319
      %1362 = vmatprep.subr.bf16.mxu0 0
      %1363 = vmatpush1.bf16.msra.mxu0 0
      %1364 = vmatprep.subr.bf16.mxu0 0
      %1365 = vmatpush1.bf16.msra.mxu0 0
      %1366 = vmatprep.subr.bf16.mxu0 0
      %1367 = vmatpush1.bf16.msra.mxu0 0
      %1368 = vmatprep.subr.bf16.mxu0 0
      %1369 = vmatpush1.bf16.msra.mxu0 0
      %1370 = vmatprep.subr.bf16.mxu0 0
      %1371 = vmatpush1.bf16.msra.mxu0 0
      %1372 = vmatprep.subr.bf16.mxu0 0
      %1373 = vmatpush1.bf16.msra.mxu0 0
      %1374 = vmatprep.subr.bf16.mxu0 0
      %1375 = vmatpush1.bf16.msra.mxu0 0
      %1376 = vmatprep.subr.bf16.mxu0 0
      %1377 = vmatpush1.bf16.msra.mxu0 0
      %1378 = vmatprep.subr.bf16.mxu0 0
      %1379 = vmatpush1.bf16.msra.mxu0 0
      %1380 = vmatprep.subr.bf16.mxu0 0
      %1381 = vmatpush1.bf16.msra.mxu0 0
      %1382 = vmatprep.subr.bf16.mxu0 0
      %1383 = vmatpush1.bf16.msra.mxu0 0
      %1384 = vmatprep.subr.bf16.mxu0 0
      %1385 = vmatpush1.bf16.msra.mxu0 0
      %1386 = vmatprep.mubr.bf16.mxu0 0
      %1387 = vmatmul.mubr.bf16.gmra.mrb[0].mxu0 %v1331
      %v1388 = vpop.f32.mrb[0].mxu0
      %v1389 = vadd.f32 %v1282, %v1388
      %v1390 = vpop.f32.mrb[0].mxu0
      %v1391 = vadd.f32 %v1286, %v1390
      %v1392 = vpop.f32.mrb[0].mxu0
      %v1393 = vadd.f32 %v1282, %v1392
      %v1394 = vpop.f32.mrb[0].mxu0
      %v1395 = vadd.f32 %v1286, %v1394
      %1396 = vmatprep.mubr.bf16.mxu0 0
      %1397 = vmatmul.mubr.bf16.gmra.mrb[0].mxu0 %v1334
      %v1398 = vpop.f32.mrb[0].mxu0
      %v1399 = vadd.f32 %v1282, %v1398
      %v1400 = vpop.f32.mrb[0].mxu0
      %v1401 = vadd.f32 %v1286, %v1400
      %v1402 = vpop.f32.mrb[0].mxu0
      %v1403 = vadd.f32 %v1282, %v1402
      %v1404 = vpop.f32.mrb[0].mxu0
      %v1405 = vadd.f32 %v1286, %v1404
      %1406 = vmatprep.mubr.bf16.mxu0 0
      %1407 = vmatmul.mubr.bf16.gmra.mrb[0].mxu0 %v1337
      %v1408 = vpop.f32.mrb[0].mxu0
      %v1409 = vadd.f32 %v1282, %v1408
      %v1410 = vpop.f32.mrb[0].mxu0
      %v1411 = vadd.f32 %v1286, %v1410
      %v1412 = vpop.f32.mrb[0].mxu0
      %v1413 = vadd.f32 %v1282, %v1412
      %v1414 = vpop.f32.mrb[0].mxu0
      %v1415 = vadd.f32 %v1286, %v1414
      %1416 = vmatprep.mubr.bf16.mxu0 0
      %1417 = vmatmul.mubr.bf16.gmra.mrb[0].mxu0 %v1340
      %v1418 = vpop.f32.mrb[0].mxu0
      %v1419 = vadd.f32 %v1282, %v1418
      %v1420 = vpop.f32.mrb[0].mxu0
      %v1421 = vadd.f32 %v1286, %v1420
      %v1422 = vpop.f32.mrb[0].mxu0
      %v1423 = vadd.f32 %v1282, %v1422
      %v1424 = vpop.f32.mrb[0].mxu0
      %v1425 = vadd.f32 %v1286, %v1424
      %1426 = vmatprep.mubr.bf16.mxu0 0
      %1427 = vmatmul.mubr.bf16.gmra.mrb[0].mxu0 %v1343
      %v1428 = vpop.f32.mrb[0].mxu0
      %v1429 = vadd.f32 %v1282, %v1428
      %v1430 = vpop.f32.mrb[0].mxu0
      %v1431 = vadd.f32 %v1286, %v1430
      %v1432 = vpop.f32.mrb[0].mxu0
      %v1433 = vadd.f32 %v1282, %v1432
      %v1434 = vpop.f32.mrb[0].mxu0
      %v1435 = vadd.f32 %v1286, %v1434
      %1436 = vmatprep.mubr.bf16.mxu0 0
      %1437 = vmatmul.mubr.bf16.gmra.mrb[0].mxu0 %v1346
      %v1438 = vpop.f32.mrb[0].mxu0
      %v1439 = vadd.f32 %v1282, %v1438
      %v1440 = vpop.f32.mrb[0].mxu0
      %v1441 = vadd.f32 %v1286, %v1440
      %v1442 = vpop.f32.mrb[0].mxu0
      %v1443 = vadd.f32 %v1282, %v1442
      %v1444 = vpop.f32.mrb[0].mxu0
      %v1445 = vadd.f32 %v1286, %v1444
      %1446 = vmatprep.mubr.bf16.mxu0 0
      %1447 = vmatmul.mubr.bf16.gmra.mrb[0].mxu0 %v1349
      %v1448 = vpop.f32.mrb[0].mxu0
      %v1449 = vadd.f32 %v1282, %v1448
      %v1450 = vpop.f32.mrb[0].mxu0
      %v1451 = vadd.f32 %v1286, %v1450
      %v1452 = vpop.f32.mrb[0].mxu0
      %v1453 = vadd.f32 %v1282, %v1452
      %v1454 = vpop.f32.mrb[0].mxu0
      %v1455 = vadd.f32 %v1286, %v1454
      %1456 = vmatprep.mubr.bf16.mxu0 0
      %1457 = vmatmul.mubr.bf16.gmra.mrb[0].mxu0 %v1352
      %v1458 = vpop.f32.mrb[0].mxu0
      %v1459 = vadd.f32 %v1282, %v1458
      %v1460 = vpop.f32.mrb[0].mxu0
      %v1461 = vadd.f32 %v1286, %v1460
      %v1462 = vpop.f32.mrb[0].mxu0
      %v1463 = vadd.f32 %v1282, %v1462
      %v1464 = vpop.f32.mrb[0].mxu0
      %v1465 = vadd.f32 %v1286, %v1464
      %1466 = vdwg.mxu0
      %v1467 = vxor.u32 %v1389, 2147483648
      %v1468 = vxor.u32 %v1393, 2147483648
      %v1469 = vxor.u32 %v1399, 2147483648
      %v1470 = vxor.u32 %v1403, 2147483648
      %v1471 = vxor.u32 %v1409, 2147483648
      %v1472 = vxor.u32 %v1413, 2147483648
      %v1473 = vxor.u32 %v1419, 2147483648
      %v1474 = vxor.u32 %v1423, 2147483648
      %v1475 = vxor.u32 %v1429, 2147483648
      %v1476 = vxor.u32 %v1433, 2147483648
      %v1477 = vxor.u32 %v1439, 2147483648
      %v1478 = vxor.u32 %v1443, 2147483648
      %v1479 = vxor.u32 %v1449, 2147483648
      %v1480 = vxor.u32 %v1453, 2147483648
      %v1481 = vxor.u32 %v1459, 2147483648
      %v1482 = vxor.u32 %v1463, 2147483648
      %v1483 = vmul.f32 %v1467, 1.442695
      %v1484 = vpow.pop %v1483
      %v1485 = vmul.f32 %v1468, 1.442695
      %v1486 = vpow.pop %v1485
      %v1487 = vmul.f32 %v1469, 1.442695
      %v1488 = vpow.pop %v1487
      %v1489 = vmul.f32 %v1470, 1.442695
      %v1490 = vpow.pop %v1489
      %v1491 = vmul.f32 %v1471, 1.442695
      %v1492 = vpow.pop %v1491
      %v1493 = vmul.f32 %v1472, 1.442695
      %v1494 = vpow.pop %v1493
      %v1495 = vmul.f32 %v1473, 1.442695
      %v1496 = vpow.pop %v1495
      %v1497 = vmul.f32 %v1474, 1.442695
      %v1498 = vpow.pop %v1497
      %v1499 = vmul.f32 %v1475, 1.442695
      %v1500 = vpow.pop %v1499
      %v1501 = vmul.f32 %v1476, 1.442695
      %v1502 = vpow.pop %v1501
      %v1503 = vmul.f32 %v1477, 1.442695
      %v1504 = vpow.pop %v1503
      %v1505 = vmul.f32 %v1478, 1.442695
      %v1506 = vpow.pop %v1505
      %v1507 = vmul.f32 %v1479, 1.442695
      %v1508 = vpow.pop %v1507
      %v1509 = vmul.f32 %v1480, 1.442695
      %v1510 = vpow.pop %v1509
      %v1511 = vmul.f32 %v1481, 1.442695
      %v1512 = vpow.pop %v1511
      %v1513 = vmul.f32 %v1482, 1.442695
      %v1514 = vpow.pop %v1513
      %v1515 = vadd.f32 %v1484, 1.0
      %v1516 = vadd.f32 %v1486, 1.0
      %v1517 = vadd.f32 %v1488, 1.0
      %v1518 = vadd.f32 %v1490, 1.0
      %v1519 = vadd.f32 %v1492, 1.0
      %v1520 = vadd.f32 %v1494, 1.0
      %v1521 = vadd.f32 %v1496, 1.0
      %v1522 = vadd.f32 %v1498, 1.0
      %v1523 = vadd.f32 %v1500, 1.0
      %v1524 = vadd.f32 %v1502, 1.0
      %v1525 = vadd.f32 %v1504, 1.0
      %v1526 = vadd.f32 %v1506, 1.0
      %v1527 = vadd.f32 %v1508, 1.0
      %v1528 = vadd.f32 %v1510, 1.0
      %v1529 = vadd.f32 %v1512, 1.0
      %v1530 = vadd.f32 %v1514, 1.0
      %v1531 = vrcp.pop %v1515
      %v1532 = vmul.f32 1.0, %v1531
      %v1533 = vrcp.pop %v1516
      %v1534 = vmul.f32 1.0, %v1533
      %v1535 = vrcp.pop %v1517
      %v1536 = vmul.f32 1.0, %v1535
      %v1537 = vrcp.pop %v1518
      %v1538 = vmul.f32 1.0, %v1537
      %v1539 = vrcp.pop %v1519
      %v1540 = vmul.f32 1.0, %v1539
      %v1541 = vrcp.pop %v1520
      %v1542 = vmul.f32 1.0, %v1541
      %v1543 = vrcp.pop %v1521
      %v1544 = vmul.f32 1.0, %v1543
      %v1545 = vrcp.pop %v1522
      %v1546 = vmul.f32 1.0, %v1545
      %v1547 = vrcp.pop %v1523
      %v1548 = vmul.f32 1.0, %v1547
      %v1549 = vrcp.pop %v1524
      %v1550 = vmul.f32 1.0, %v1549
      %v1551 = vrcp.pop %v1525
      %v1552 = vmul.f32 1.0, %v1551
      %v1553 = vrcp.pop %v1526
      %v1554 = vmul.f32 1.0, %v1553
      %v1555 = vrcp.pop %v1527
      %v1556 = vmul.f32 1.0, %v1555
      %v1557 = vrcp.pop %v1528
      %v1558 = vmul.f32 1.0, %v1557
      %v1559 = vrcp.pop %v1529
      %v1560 = vmul.f32 1.0, %v1559
      %v1561 = vrcp.pop %v1530
      %v1562 = vmul.f32 1.0, %v1561
      %v1563 = vtanh.pop %v1389
      %v1564 = vtanh.pop %v1393
      %v1565 = vtanh.pop %v1399
      %v1566 = vtanh.pop %v1403
      %v1567 = vtanh.pop %v1409
      %v1568 = vtanh.pop %v1413
      %v1569 = vtanh.pop %v1419
      %v1570 = vtanh.pop %v1423
      %v1571 = vtanh.pop %v1429
      %v1572 = vtanh.pop %v1433
      %v1573 = vtanh.pop %v1439
      %v1574 = vtanh.pop %v1443
      %v1575 = vtanh.pop %v1449
      %v1576 = vtanh.pop %v1453
      %v1577 = vtanh.pop %v1459
      %v1578 = vtanh.pop %v1463
      %v1579 = vxor.u32 %v1391, 2147483648
      %v1580 = vxor.u32 %v1395, 2147483648
      %v1581 = vxor.u32 %v1401, 2147483648
      %v1582 = vxor.u32 %v1405, 2147483648
      %v1583 = vxor.u32 %v1411, 2147483648
      %v1584 = vxor.u32 %v1415, 2147483648
      %v1585 = vxor.u32 %v1421, 2147483648
      %v1586 = vxor.u32 %v1425, 2147483648
      %v1587 = vxor.u32 %v1431, 2147483648
      %v1588 = vxor.u32 %v1435, 2147483648
      %v1589 = vxor.u32 %v1441, 2147483648
      %v1590 = vxor.u32 %v1445, 2147483648
      %v1591 = vxor.u32 %v1451, 2147483648
      %v1592 = vxor.u32 %v1455, 2147483648
      %v1593 = vxor.u32 %v1461, 2147483648
      %v1594 = vxor.u32 %v1465, 2147483648
      %v1595 = vmul.f32 %v1579, 1.442695
      %v1596 = vpow.pop %v1595
      %v1597 = vmul.f32 %v1580, 1.442695
      %v1598 = vpow.pop %v1597
      %v1599 = vmul.f32 %v1581, 1.442695
      %v1600 = vpow.pop %v1599
      %v1601 = vmul.f32 %v1582, 1.442695
      %v1602 = vpow.pop %v1601
      %v1603 = vmul.f32 %v1583, 1.442695
      %v1604 = vpow.pop %v1603
      %v1605 = vmul.f32 %v1584, 1.442695
      %v1606 = vpow.pop %v1605
      %v1607 = vmul.f32 %v1585, 1.442695
      %v1608 = vpow.pop %v1607
      %v1609 = vmul.f32 %v1586, 1.442695
      %v1610 = vpow.pop %v1609
      %v1611 = vmul.f32 %v1587, 1.442695
      %v1612 = vpow.pop %v1611
      %v1613 = vmul.f32 %v1588, 1.442695
      %v1614 = vpow.pop %v1613
      %v1615 = vmul.f32 %v1589, 1.442695
      %v1616 = vpow.pop %v1615
      %v1617 = vmul.f32 %v1590, 1.442695
      %v1618 = vpow.pop %v1617
      %v1619 = vmul.f32 %v1591, 1.442695
      %v1620 = vpow.pop %v1619
      %v1621 = vmul.f32 %v1592, 1.442695
      %v1622 = vpow.pop %v1621
      %v1623 = vmul.f32 %v1593, 1.442695
      %v1624 = vpow.pop %v1623
      %v1625 = vmul.f32 %v1594, 1.442695
      %v1626 = vpow.pop %v1625
      %v1627 = vadd.f32 %v1596, 1.0
      %v1628 = vadd.f32 %v1598, 1.0
      %v1629 = vadd.f32 %v1600, 1.0
      %v1630 = vadd.f32 %v1602, 1.0
      %v1631 = vadd.f32 %v1604, 1.0
      %v1632 = vadd.f32 %v1606, 1.0
      %v1633 = vadd.f32 %v1608, 1.0
      %v1634 = vadd.f32 %v1610, 1.0
      %v1635 = vadd.f32 %v1612, 1.0
      %v1636 = vadd.f32 %v1614, 1.0
      %v1637 = vadd.f32 %v1616, 1.0
      %v1638 = vadd.f32 %v1618, 1.0
      %v1639 = vadd.f32 %v1620, 1.0
      %v1640 = vadd.f32 %v1622, 1.0
      %v1641 = vadd.f32 %v1624, 1.0
      %v1642 = vadd.f32 %v1626, 1.0
      %v1643 = vrcp.pop %v1627
      %v1644 = vmul.f32 1.0, %v1643
      %v1645 = vrcp.pop %v1628
      %v1646 = vmul.f32 1.0, %v1645
      %v1647 = vrcp.pop %v1629
      %v1648 = vmul.f32 1.0, %v1647
      %v1649 = vrcp.pop %v1630
      %v1650 = vmul.f32 1.0, %v1649
      %v1651 = vrcp.pop %v1631
      %v1652 = vmul.f32 1.0, %v1651
      %v1653 = vrcp.pop %v1632
      %v1654 = vmul.f32 1.0, %v1653
      %v1655 = vrcp.pop %v1633
      %v1656 = vmul.f32 1.0, %v1655
      %v1657 = vrcp.pop %v1634
      %v1658 = vmul.f32 1.0, %v1657
      %v1659 = vrcp.pop %v1635
      %v1660 = vmul.f32 1.0, %v1659
      %v1661 = vrcp.pop %v1636
      %v1662 = vmul.f32 1.0, %v1661
      %v1663 = vrcp.pop %v1637
      %v1664 = vmul.f32 1.0, %v1663
      %v1665 = vrcp.pop %v1638
      %v1666 = vmul.f32 1.0, %v1665
      %v1667 = vrcp.pop %v1639
      %v1668 = vmul.f32 1.0, %v1667
      %v1669 = vrcp.pop %v1640
      %v1670 = vmul.f32 1.0, %v1669
      %v1671 = vrcp.pop %v1641
      %v1672 = vmul.f32 1.0, %v1671
      %v1673 = vrcp.pop %v1642
      %v1674 = vmul.f32 1.0, %v1673
      %1691 = vrot.lane.b32.xlu0 %v1563, 64
      %v1692 = vpop.permute.xlu0 %1691
      %1693 = vrot.lane.b32.xlu0 %v1564, 64
      %v1694 = vpop.permute.xlu0 %1693
      %1695 = vrot.lane.b32.xlu0 %v1565, 64
      %v1696 = vpop.permute.xlu0 %1695
      %1697 = vrot.lane.b32.xlu0 %v1566, 64
      %v1698 = vpop.permute.xlu0 %1697
      %1699 = vrot.lane.b32.xlu0 %v1567, 64
      %v1700 = vpop.permute.xlu0 %1699
      %1701 = vrot.lane.b32.xlu0 %v1568, 64
      %v1702 = vpop.permute.xlu0 %1701
      %1703 = vrot.lane.b32.xlu0 %v1569, 64
      %v1704 = vpop.permute.xlu0 %1703
      %1705 = vrot.lane.b32.xlu0 %v1570, 64
      %v1706 = vpop.permute.xlu0 %1705
      %1707 = vrot.lane.b32.xlu0 %v1571, 64
      %v1708 = vpop.permute.xlu0 %1707
      %1709 = vrot.lane.b32.xlu0 %v1572, 64
      %v1710 = vpop.permute.xlu0 %1709
      %1711 = vrot.lane.b32.xlu0 %v1573, 64
      %v1712 = vpop.permute.xlu0 %1711
      %1713 = vrot.lane.b32.xlu0 %v1574, 64
      %v1714 = vpop.permute.xlu0 %1713
      %1715 = vrot.lane.b32.xlu0 %v1575, 64
      %v1716 = vpop.permute.xlu0 %1715
      %1717 = vrot.lane.b32.xlu0 %v1576, 64
      %v1718 = vpop.permute.xlu0 %1717
      %1719 = vrot.lane.b32.xlu0 %v1577, 64
      %v1720 = vpop.permute.xlu0 %1719
      %1721 = vrot.lane.b32.xlu0 %v1578, 64
      %v1722 = vpop.permute.xlu0 %1721
      %v1739 = vmul.f32 %v1532, %v1692
      %v1740 = vmul.f32 %v1534, %v1694
      %v1741 = vmul.f32 %v1536, %v1696
      %v1742 = vmul.f32 %v1538, %v1698
      %v1743 = vmul.f32 %v1540, %v1700
      %v1744 = vmul.f32 %v1542, %v1702
      %v1745 = vmul.f32 %v1544, %v1704
      %v1746 = vmul.f32 %v1546, %v1706
      %v1747 = vmul.f32 %v1548, %v1708
      %v1748 = vmul.f32 %v1550, %v1710
      %v1749 = vmul.f32 %v1552, %v1712
      %v1750 = vmul.f32 %v1554, %v1714
      %v1751 = vmul.f32 %v1556, %v1716
      %v1752 = vmul.f32 %v1558, %v1718
      %v1753 = vmul.f32 %v1560, %v1720
      %v1754 = vmul.f32 %v1562, %v1722
      %v1755 = vtanh.pop %v1739
      %v1756 = vtanh.pop %v1740
      %v1757 = vtanh.pop %v1741
      %v1758 = vtanh.pop %v1742
      %v1759 = vtanh.pop %v1743
      %v1760 = vtanh.pop %v1744
      %v1761 = vtanh.pop %v1745
      %v1762 = vtanh.pop %v1746
      %v1763 = vtanh.pop %v1747
      %v1764 = vtanh.pop %v1748
      %v1765 = vtanh.pop %v1749
      %v1766 = vtanh.pop %v1750
      %v1767 = vtanh.pop %v1751
      %v1768 = vtanh.pop %v1752
      %v1769 = vtanh.pop %v1753
      %v1770 = vtanh.pop %v1754
      %v1771 = vmul.f32 %v1644, %v1755
      %v1772 = vmul.f32 %v1646, %v1756
      %v1773 = vmul.f32 %v1648, %v1757
      %v1774 = vmul.f32 %v1650, %v1758
      %v1775 = vmul.f32 %v1652, %v1759
      %v1776 = vmul.f32 %v1654, %v1760
      %v1777 = vmul.f32 %v1656, %v1761
      %v1778 = vmul.f32 %v1658, %v1762
      %v1779 = vmul.f32 %v1660, %v1763
      %v1780 = vmul.f32 %v1662, %v1764
      %v1781 = vmul.f32 %v1664, %v1765
      %v1782 = vmul.f32 %v1666, %v1766
      %v1783 = vmul.f32 %v1668, %v1767
      %v1784 = vmul.f32 %v1670, %v1768
      %v1785 = vmul.f32 %v1672, %v1769
      %v1786 = vmul.f32 %v1674, %v1770
      %v1787 = vpack.c.bf16 %v1772, %v1771
      %v1788 = vpack.c.bf16 %v1774, %v1773
      %v1789 = vpack.c.bf16 %v1776, %v1775
      %v1790 = vpack.c.bf16 %v1778, %v1777
      %v1791 = vpack.c.bf16 %v1780, %v1779
      %v1792 = vpack.c.bf16 %v1782, %v1781
      %v1793 = vpack.c.bf16 %v1784, %v1783
      %v1794 = vpack.c.bf16 %v1786, %v1785
      %v1795 = vld [vmem:[%s9] sm:$0xf]
      %v1796 = vld [vmem:[%s9 + $0x4] sm:$0xf]
      %v1797 = vld [vmem:[%s9 + $0x8] sm:$0xf]
      %v1798 = vld [vmem:[%s9 + $0xc] sm:$0xf]
      %v1799 = vld [vmem:[%s9 + $0x10] sm:$0xf]
      %v1800 = vld [vmem:[%s9 + $0x14] sm:$0xf]
      %v1801 = vld [vmem:[%s9 + $0x18] sm:$0xf]
      %v1802 = vld [vmem:[%s9 + $0x1c] sm:$0xf]
      %v1803 = vld [vmem:[%s10] sm:$0x1]
      %v1805 = vlaneseq
      %v1806 = vshrl.u32 %v1805, 7
      %v1807 = vsub.s32 0, %v1806
      %v1808 = vrot.slane %v1803, %v1807
      %v1818 = vunpack.c.l.b16 %v1795
      %v1819 = vunpack.c.l.b16 %v1796
      %v1820 = vunpack.c.l.b16 %v1797
      %v1821 = vunpack.c.l.b16 %v1798
      %v1822 = vunpack.c.l.b16 %v1799
      %v1823 = vunpack.c.l.b16 %v1800
      %v1824 = vunpack.c.l.b16 %v1801
      %v1825 = vunpack.c.l.b16 %v1802
      %v1826 = vpack.c.b16 %v1819, %v1818
      %v1827 = vpack.c.b16 %v1821, %v1820
      %v1828 = vpack.c.b16 %v1823, %v1822
      %v1829 = vpack.c.b16 %v1825, %v1824
      %v1835 = vsel %vm1329, %v1787, 0
      %v1838 = vsel %vm1329, %v1788, 0
      %v1841 = vsel %vm1329, %v1789, 0
      %v1844 = vsel %vm1329, %v1790, 0
      %v1847 = vsel %vm1329, %v1791, 0
      %v1850 = vsel %vm1329, %v1792, 0
      %v1853 = vsel %vm1329, %v1793, 0
      %v1856 = vsel %vm1329, %v1794, 0
      %1858 = vmatprep.subr.bf16.mxu0 0
      %1859 = vmatpush1.bf16.msra.mxu0 %v1826
      %1860 = vmatprep.subr.bf16.mxu0 0
      %1861 = vmatpush1.bf16.msra.mxu0 %v1827
      %1862 = vmatprep.subr.bf16.mxu0 0
      %1863 = vmatpush1.bf16.msra.mxu0 %v1828
      %1864 = vmatprep.subr.bf16.mxu0 0
      %1865 = vmatpush1.bf16.msra.mxu0 %v1829
      %1866 = vmatprep.subr.bf16.mxu0 0
      %1867 = vmatpush1.bf16.msra.mxu0 0
      %1868 = vmatprep.subr.bf16.mxu0 0
      %1869 = vmatpush1.bf16.msra.mxu0 0
      %1870 = vmatprep.subr.bf16.mxu0 0
      %1871 = vmatpush1.bf16.msra.mxu0 0
      %1872 = vmatprep.subr.bf16.mxu0 0
      %1873 = vmatpush1.bf16.msra.mxu0 0
      %1874 = vmatprep.subr.bf16.mxu0 0
      %1875 = vmatpush1.bf16.msra.mxu0 0
      %1876 = vmatprep.subr.bf16.mxu0 0
      %1877 = vmatpush1.bf16.msra.mxu0 0
      %1878 = vmatprep.subr.bf16.mxu0 0
      %1879 = vmatpush1.bf16.msra.mxu0 0
      %1880 = vmatprep.subr.bf16.mxu0 0
      %1881 = vmatpush1.bf16.msra.mxu0 0
      %1882 = vmatprep.subr.bf16.mxu0 0
      %1883 = vmatpush1.bf16.msra.mxu0 0
      %1884 = vmatprep.subr.bf16.mxu0 0
      %1885 = vmatpush1.bf16.msra.mxu0 0
      %1886 = vmatprep.subr.bf16.mxu0 0
      %1887 = vmatpush1.bf16.msra.mxu0 0
      %1888 = vmatprep.subr.bf16.mxu0 0
      %1889 = vmatpush1.bf16.msra.mxu0 0
      %1890 = vmatprep.mubr.bf16.mxu0 0
      %1891 = vmatmul.mubr.bf16.gmra.mrb[0].mxu0 %v1835
      %v1892 = vpop.f32.mrb[0].mxu0
      %v1893 = vadd.f32 %v1808, %v1892
      %v1894 = vpop.f32.mrb[0].mxu0
      %v1895 = vpop.f32.mrb[0].mxu0
      %v1896 = vadd.f32 %v1808, %v1895
      %v1897 = vpop.f32.mrb[0].mxu0
      %1898 = vmatprep.mubr.bf16.mxu0 0
      %1899 = vmatmul.mubr.bf16.gmra.mrb[0].mxu0 %v1838
      %v1900 = vpop.f32.mrb[0].mxu0
      %v1901 = vadd.f32 %v1808, %v1900
      %v1902 = vpop.f32.mrb[0].mxu0
      %v1903 = vpop.f32.mrb[0].mxu0
      %v1904 = vadd.f32 %v1808, %v1903
      %v1905 = vpop.f32.mrb[0].mxu0
      %1906 = vmatprep.mubr.bf16.mxu0 0
      %1907 = vmatmul.mubr.bf16.gmra.mrb[0].mxu0 %v1841
      %v1908 = vpop.f32.mrb[0].mxu0
      %v1909 = vadd.f32 %v1808, %v1908
      %v1910 = vpop.f32.mrb[0].mxu0
      %v1911 = vpop.f32.mrb[0].mxu0
      %v1912 = vadd.f32 %v1808, %v1911
      %v1913 = vpop.f32.mrb[0].mxu0
      %1914 = vmatprep.mubr.bf16.mxu0 0
      %1915 = vmatmul.mubr.bf16.gmra.mrb[0].mxu0 %v1844
      %v1916 = vpop.f32.mrb[0].mxu0
      %v1917 = vadd.f32 %v1808, %v1916
      %v1918 = vpop.f32.mrb[0].mxu0
      %v1919 = vpop.f32.mrb[0].mxu0
      %v1920 = vadd.f32 %v1808, %v1919
      %v1921 = vpop.f32.mrb[0].mxu0
      %1922 = vmatprep.mubr.bf16.mxu0 0
      %1923 = vmatmul.mubr.bf16.gmra.mrb[0].mxu0 %v1847
      %v1924 = vpop.f32.mrb[0].mxu0
      %v1925 = vadd.f32 %v1808, %v1924
      %v1926 = vpop.f32.mrb[0].mxu0
      %v1927 = vpop.f32.mrb[0].mxu0
      %v1928 = vadd.f32 %v1808, %v1927
      %v1929 = vpop.f32.mrb[0].mxu0
      %1930 = vmatprep.mubr.bf16.mxu0 0
      %1931 = vmatmul.mubr.bf16.gmra.mrb[0].mxu0 %v1850
      %v1932 = vpop.f32.mrb[0].mxu0
      %v1933 = vadd.f32 %v1808, %v1932
      %v1934 = vpop.f32.mrb[0].mxu0
      %v1935 = vpop.f32.mrb[0].mxu0
      %v1936 = vadd.f32 %v1808, %v1935
      %v1937 = vpop.f32.mrb[0].mxu0
      %1938 = vmatprep.mubr.bf16.mxu0 0
      %1939 = vmatmul.mubr.bf16.gmra.mrb[0].mxu0 %v1853
      %v1940 = vpop.f32.mrb[0].mxu0
      %v1941 = vadd.f32 %v1808, %v1940
      %v1942 = vpop.f32.mrb[0].mxu0
      %v1943 = vpop.f32.mrb[0].mxu0
      %v1944 = vadd.f32 %v1808, %v1943
      %v1945 = vpop.f32.mrb[0].mxu0
      %1946 = vmatprep.mubr.bf16.mxu0 0
      %1947 = vmatmul.mubr.bf16.gmra.mrb[0].mxu0 %v1856
      %v1948 = vpop.f32.mrb[0].mxu0
      %v1949 = vadd.f32 %v1808, %v1948
      %v1950 = vpop.f32.mrb[0].mxu0
      %v1951 = vpop.f32.mrb[0].mxu0
      %v1952 = vadd.f32 %v1808, %v1951
      %v1953 = vpop.f32.mrb[0].mxu0
      %1954 = vdwg.mxu0
      %vm1955 = vcmp.gt.f32.partialorder %v1893, 0.0
      %vm1956 = vcmp.gt.f32.partialorder %v1896, 0.0
      %vm1957 = vcmp.gt.f32.partialorder %v1901, 0.0
      %vm1958 = vcmp.gt.f32.partialorder %v1904, 0.0
      %vm1959 = vcmp.gt.f32.partialorder %v1909, 0.0
      %vm1960 = vcmp.gt.f32.partialorder %v1912, 0.0
      %vm1961 = vcmp.gt.f32.partialorder %v1917, 0.0
      %vm1962 = vcmp.gt.f32.partialorder %v1920, 0.0
      %vm1963 = vcmp.gt.f32.partialorder %v1925, 0.0
      %vm1964 = vcmp.gt.f32.partialorder %v1928, 0.0
      %vm1965 = vcmp.gt.f32.partialorder %v1933, 0.0
      %vm1966 = vcmp.gt.f32.partialorder %v1936, 0.0
      %vm1967 = vcmp.gt.f32.partialorder %v1941, 0.0
      %vm1968 = vcmp.gt.f32.partialorder %v1944, 0.0
      %vm1969 = vcmp.gt.f32.partialorder %v1949, 0.0
      %vm1970 = vcmp.gt.f32.partialorder %v1952, 0.0
      %v1971 = vmul.f32 %v1893, 0.1
      %v1972 = vmul.f32 %v1896, 0.1
      %v1973 = vmul.f32 %v1901, 0.1
      %v1974 = vmul.f32 %v1904, 0.1
      %v1975 = vmul.f32 %v1909, 0.1
      %v1976 = vmul.f32 %v1912, 0.1
      %v1977 = vmul.f32 %v1917, 0.1
      %v1978 = vmul.f32 %v1920, 0.1
      %v1979 = vmul.f32 %v1925, 0.1
      %v1980 = vmul.f32 %v1928, 0.1
      %v1981 = vmul.f32 %v1933, 0.1
      %v1982 = vmul.f32 %v1936, 0.1
      %v1983 = vmul.f32 %v1941, 0.1
      %v1984 = vmul.f32 %v1944, 0.1
      %v1985 = vmul.f32 %v1949, 0.1
      %v1986 = vmul.f32 %v1952, 0.1
      %v1987 = vsel %vm1955, %v1893, %v1971
      %v1988 = vsel %vm1956, %v1896, %v1972
      %v1989 = vsel %vm1957, %v1901, %v1973
      %v1990 = vsel %vm1958, %v1904, %v1974
      %v1991 = vsel %vm1959, %v1909, %v1975
      %v1992 = vsel %vm1960, %v1912, %v1976
      %v1993 = vsel %vm1961, %v1917, %v1977
      %v1994 = vsel %vm1962, %v1920, %v1978
      %v1995 = vsel %vm1963, %v1925, %v1979
      %v1996 = vsel %vm1964, %v1928, %v1980
      %v1997 = vsel %vm1965, %v1933, %v1981
      %v1998 = vsel %vm1966, %v1936, %v1982
      %v1999 = vsel %vm1967, %v1941, %v1983
      %v2000 = vsel %vm1968, %v1944, %v1984
      %v2001 = vsel %vm1969, %v1949, %v1985
      %v2002 = vsel %vm1970, %v1952, %v1986
      %v2003 = vpack.c.bf16 %v1988, %v1987
      %v2004 = vpack.c.bf16 %v1990, %v1989
      %v2005 = vpack.c.bf16 %v1992, %v1991
      %v2006 = vpack.c.bf16 %v1994, %v1993
      %v2007 = vpack.c.bf16 %v1996, %v1995
      %v2008 = vpack.c.bf16 %v1998, %v1997
      %v2009 = vpack.c.bf16 %v2000, %v1999
      %v2010 = vpack.c.bf16 %v2002, %v2001
      %2019 = vrot.lane.b32.xlu0 %v463, 32
      %v2020 = vpop.permute.xlu0 %2019
      %2021 = vrot.lane.b32.xlu0 %v464, 32
      %v2022 = vpop.permute.xlu0 %2021
      %2023 = vrot.lane.b32.xlu0 %v465, 32
      %v2024 = vpop.permute.xlu0 %2023
      %2025 = vrot.lane.b32.xlu0 %v466, 32
      %v2026 = vpop.permute.xlu0 %2025
      %2027 = vrot.lane.b32.xlu0 %v467, 32
      %v2028 = vpop.permute.xlu0 %2027
      %2029 = vrot.lane.b32.xlu0 %v468, 32
      %v2030 = vpop.permute.xlu0 %2029
      %2031 = vrot.lane.b32.xlu0 %v469, 32
      %v2032 = vpop.permute.xlu0 %2031
      %2033 = vrot.lane.b32.xlu0 %v470, 32
      %v2034 = vpop.permute.xlu0 %2033
      %v2037 = vsel %vm507, %v2003, %v2020
      %v2040 = vsel %vm507, %v2004, %v2022
      %v2043 = vsel %vm507, %v2005, %v2024
      %v2046 = vsel %vm507, %v2006, %v2026
      %v2049 = vsel %vm507, %v2007, %v2028
      %v2052 = vsel %vm507, %v2008, %v2030
      %v2055 = vsel %vm507, %v2009, %v2032
      %v2058 = vsel %vm507, %v2010, %v2034
      %v2059 = vld [vmem:[%s11] sm:$0xf]
      %v2060 = vld [vmem:[%s11 + $0x4] sm:$0xf]
      %v2061 = vld [vmem:[%s11 + $0x8] sm:$0xf]
      %v2062 = vld [vmem:[%s11 + $0xc] sm:$0xf]
      %v2063 = vld [vmem:[%s11 + $0x10] sm:$0xf]
      %v2064 = vld [vmem:[%s11 + $0x14] sm:$0xf]
      %v2065 = vld [vmem:[%s11 + $0x18] sm:$0xf]
      %v2066 = vld [vmem:[%s11 + $0x1c] sm:$0xf]
      %v2067 = vld [vmem:[#allocation2] sm:$0x1]
      %v2069 = vlaneseq
      %v2070 = vshrl.u32 %v2069, 7
      %v2071 = vsub.s32 0, %v2070
      %v2072 = vrot.slane %v2067, %v2071
      %v2082 = vunpack.c.l.b16 %v2059
      %v2083 = vunpack.c.l.b16 %v2060
      %v2084 = vunpack.c.l.b16 %v2061
      %v2085 = vunpack.c.l.b16 %v2062
      %v2086 = vunpack.c.l.b16 %v2063
      %v2087 = vunpack.c.l.b16 %v2064
      %v2088 = vunpack.c.l.b16 %v2065
      %v2089 = vunpack.c.l.b16 %v2066
      %v2090 = vpack.c.b16 %v2083, %v2082
      %v2091 = vpack.c.b16 %v2085, %v2084
      %v2092 = vpack.c.b16 %v2087, %v2086
      %v2093 = vpack.c.b16 %v2089, %v2088
      %v2098 = vsel %vm1329, %v2037, 0
      %v2100 = vsel %vm1329, %v2040, 0
      %v2102 = vsel %vm1329, %v2043, 0
      %v2104 = vsel %vm1329, %v2046, 0
      %v2106 = vsel %vm1329, %v2049, 0
      %v2108 = vsel %vm1329, %v2052, 0
      %v2110 = vsel %vm1329, %v2055, 0
      %v2112 = vsel %vm1329, %v2058, 0
      %2114 = vmatprep.subr.bf16.mxu0 0
      %2115 = vmatpush1.bf16.msra.mxu0 %v2090
      %2116 = vmatprep.subr.bf16.mxu0 0
      %2117 = vmatpush1.bf16.msra.mxu0 %v2091
      %2118 = vmatprep.subr.bf16.mxu0 0
      %2119 = vmatpush1.bf16.msra.mxu0 %v2092
      %2120 = vmatprep.subr.bf16.mxu0 0
      %2121 = vmatpush1.bf16.msra.mxu0 %v2093
      %2122 = vmatprep.subr.bf16.mxu0 0
      %2123 = vmatpush1.bf16.msra.mxu0 0
      %2124 = vmatprep.subr.bf16.mxu0 0
      %2125 = vmatpush1.bf16.msra.mxu0 0
      %2126 = vmatprep.subr.bf16.mxu0 0
      %2127 = vmatpush1.bf16.msra.mxu0 0
      %2128 = vmatprep.subr.bf16.mxu0 0
      %2129 = vmatpush1.bf16.msra.mxu0 0
      %2130 = vmatprep.subr.bf16.mxu0 0
      %2131 = vmatpush1.bf16.msra.mxu0 0
      %2132 = vmatprep.subr.bf16.mxu0 0
      %2133 = vmatpush1.bf16.msra.mxu0 0
      %2134 = vmatprep.subr.bf16.mxu0 0
      %2135 = vmatpush1.bf16.msra.mxu0 0
      %2136 = vmatprep.subr.bf16.mxu0 0
      %2137 = vmatpush1.bf16.msra.mxu0 0
      %2138 = vmatprep.subr.bf16.mxu0 0
      %2139 = vmatpush1.bf16.msra.mxu0 0
      %2140 = vmatprep.subr.bf16.mxu0 0
      %2141 = vmatpush1.bf16.msra.mxu0 0
      %2142 = vmatprep.subr.bf16.mxu0 0
      %2143 = vmatpush1.bf16.msra.mxu0 0
      %2144 = vmatprep.subr.bf16.mxu0 0
      %2145 = vmatpush1.bf16.msra.mxu0 0
      %2146 = vmatprep.mubr.bf16.mxu0 0
      %2147 = vmatmul.mubr.bf16.gmra.mrb[0].mxu0 %v2098
      %v2148 = vpop.f32.mrb[0].mxu0
      %v2149 = vadd.f32 %v2072, %v2148
      %v2150 = vpop.f32.mrb[0].mxu0
      %v2151 = vpop.f32.mrb[0].mxu0
      %v2152 = vadd.f32 %v2072, %v2151
      %v2153 = vpop.f32.mrb[0].mxu0
      %2154 = vmatprep.mubr.bf16.mxu0 0
      %2155 = vmatmul.mubr.bf16.gmra.mrb[0].mxu0 %v2100
      %v2156 = vpop.f32.mrb[0].mxu0
      %v2157 = vadd.f32 %v2072, %v2156
      %v2158 = vpop.f32.mrb[0].mxu0
      %v2159 = vpop.f32.mrb[0].mxu0
      %v2160 = vadd.f32 %v2072, %v2159
      %v2161 = vpop.f32.mrb[0].mxu0
      %2162 = vmatprep.mubr.bf16.mxu0 0
      %2163 = vmatmul.mubr.bf16.gmra.mrb[0].mxu0 %v2102
      %v2164 = vpop.f32.mrb[0].mxu0
      %v2165 = vadd.f32 %v2072, %v2164
      %v2166 = vpop.f32.mrb[0].mxu0
      %v2167 = vpop.f32.mrb[0].mxu0
      %v2168 = vadd.f32 %v2072, %v2167
      %v2169 = vpop.f32.mrb[0].mxu0
      %2170 = vmatprep.mubr.bf16.mxu0 0
      %2171 = vmatmul.mubr.bf16.gmra.mrb[0].mxu0 %v2104
      %v2172 = vpop.f32.mrb[0].mxu0
      %v2173 = vadd.f32 %v2072, %v2172
      %v2174 = vpop.f32.mrb[0].mxu0
      %v2175 = vpop.f32.mrb[0].mxu0
      %v2176 = vadd.f32 %v2072, %v2175
      %v2177 = vpop.f32.mrb[0].mxu0
      %2178 = vmatprep.mubr.bf16.mxu0 0
      %2179 = vmatmul.mubr.bf16.gmra.mrb[0].mxu0 %v2106
      %v2180 = vpop.f32.mrb[0].mxu0
      %v2181 = vadd.f32 %v2072, %v2180
      %v2182 = vpop.f32.mrb[0].mxu0
      %v2183 = vpop.f32.mrb[0].mxu0
      %v2184 = vadd.f32 %v2072, %v2183
      %v2185 = vpop.f32.mrb[0].mxu0
      %2186 = vmatprep.mubr.bf16.mxu0 0
      %2187 = vmatmul.mubr.bf16.gmra.mrb[0].mxu0 %v2108
      %v2188 = vpop.f32.mrb[0].mxu0
      %v2189 = vadd.f32 %v2072, %v2188
      %v2190 = vpop.f32.mrb[0].mxu0
      %v2191 = vpop.f32.mrb[0].mxu0
      %v2192 = vadd.f32 %v2072, %v2191
      %v2193 = vpop.f32.mrb[0].mxu0
      %2194 = vmatprep.mubr.bf16.mxu0 0
      %2195 = vmatmul.mubr.bf16.gmra.mrb[0].mxu0 %v2110
      %v2196 = vpop.f32.mrb[0].mxu0
      %v2197 = vadd.f32 %v2072, %v2196
      %v2198 = vpop.f32.mrb[0].mxu0
      %v2199 = vpop.f32.mrb[0].mxu0
      %v2200 = vadd.f32 %v2072, %v2199
      %v2201 = vpop.f32.mrb[0].mxu0
      %2202 = vmatprep.mubr.bf16.mxu0 0
      %2203 = vmatmul.mubr.bf16.gmra.mrb[0].mxu0 %v2112
      %v2204 = vpop.f32.mrb[0].mxu0
      %v2205 = vadd.f32 %v2072, %v2204
      %v2206 = vpop.f32.mrb[0].mxu0
      %v2207 = vpop.f32.mrb[0].mxu0
      %v2208 = vadd.f32 %v2072, %v2207
      %v2209 = vpop.f32.mrb[0].mxu0
      %2210 = vdwg.mxu0
      %vm2211 = vcmask 7168
      %2212 = vst.msk [vmem:[%s444] sm:$0xff] %vm2211, %v2149
      %2213 = vst.msk [vmem:[%s444 + $0x8] sm:$0xff] %vm2211, %v2152
      %2214 = vst.msk [vmem:[%s444 + $0x10] sm:$0xff] %vm2211, %v2157
      %2215 = vst.msk [vmem:[%s444 + $0x18] sm:$0xff] %vm2211, %v2160
      %2216 = vst.msk [vmem:[%s444 + $0x20] sm:$0xff] %vm2211, %v2165
      %2217 = vst.msk [vmem:[%s444 + $0x28] sm:$0xff] %vm2211, %v2168
      %2218 = vst.msk [vmem:[%s444 + $0x30] sm:$0xff] %vm2211, %v2173
      %2219 = vst.msk [vmem:[%s444 + $0x38] sm:$0xff] %vm2211, %v2176
      %2220 = vst.msk [vmem:[%s444 + $0x40] sm:$0xff] %vm2211, %v2181
      %2221 = vst.msk [vmem:[%s444 + $0x48] sm:$0xff] %vm2211, %v2184
      %2222 = vst.msk [vmem:[%s444 + $0x50] sm:$0xff] %vm2211, %v2189
      %2223 = vst.msk [vmem:[%s444 + $0x58] sm:$0xff] %vm2211, %v2192
      %2224 = vst.msk [vmem:[%s444 + $0x60] sm:$0xff] %vm2211, %v2197
      %2225 = vst.msk [vmem:[%s444 + $0x68] sm:$0xff] %vm2211, %v2200
      %2226 = vst.msk [vmem:[%s444 + $0x70] sm:$0xff] %vm2211, %v2205
      %2227 = vst.msk [vmem:[%s444 + $0x78] sm:$0xff] %vm2211, %v2208
      %s2228 = smul.u32 16, %s26
      %p2229 = scmp.lt.s32.totalorder %s2228, 31
      %s2230 = scalar_select %p2229, %s2228, 31
      %s2231 = smul.addr %s2230, 8
      %s2232 = scalar_lea.vmem %s13, %s2231
      // Predicated region
      $region73: #{tpu_custom_call.1} parent=71 // pred_check
        %p2233 = pneg %p322
      $region74: #{tpu_custom_call.1} parent=71 // pred_check_branch
        %2235 = sbr.rel (%p2233) target = $region76
      $region75: #{tpu_custom_call.1} parent=71 // pred_region
        %s2236 = smul.u32 16, %s26
      $region76: #{tpu_custom_call.1} parent=71 // pred_fallthru
        _
    $region72: #{tpu_custom_call.1} parent=5 // pred_fallthru
      _
    %p2237 = scmp.le.s32.totalorder 2, %s21
    // Predicated region
    $region77: #{tpu_custom_call.1} parent=5 // pred_check
      %p2238 = pneg %p2237
    $region78: #{tpu_custom_call.1} parent=5 // pred_check_branch
      %2240 = sbr.rel (%p2238) target = $region80
    $region79: #{tpu_custom_call.1} parent=5 // pred_region
      %s2241 = ssub.s32 %s21, 2
      // Predicated region
      $region81: #{tpu_custom_call.1} parent=79 // pred_check
        %p2242 = pneg %p328
      $region82: #{tpu_custom_call.1} parent=79 // pred_check_branch
        %2244 = sbr.rel (%p2242) target = $region84
      $region83: #{tpu_custom_call.1} parent=79 // pred_region
        %s2245 = smul.u32 16, %s27
        %p2246 = scmp.lt.s32.totalorder %s2245, 31
        %s2247 = scalar_select %p2246, %s2245, 31
        %s2248 = smul.addr %s2247, 8
        %s2249 = scalar_lea.vmem %s13, %s2248
      $region84: #{tpu_custom_call.1} parent=79 // pred_fallthru
        _
    $region80: #{tpu_custom_call.1} parent=5 // pred_fallthru
      _
  $region6: #{tpu_custom_call.1} parent=0 // loop_footer
    %s25 = sadd.s32 1, %s21
  $region7: #{tpu_custom_call.1} parent=0 // loop_footer_branch
    %20 = sbr.rel target = $region3
  $region8: #{tpu_custom_call.1} parent=0 // loop_exit
    _

</llo_original>
